<compile_context>
chip_gen: v6e
topology: v6e:2x2x1
jax: 0.10.0
libtpu: 0.0.40
codegen_flags: <defaults>
</compile_context>

<pallas_src>
import jax
import jax.numpy as jnp
from jax import lax
from jax.experimental import pallas as pl
from jax.experimental.pallas import tpu as pltpu

MAX_ITERS = 20           # hard cap; well-conditioned inputs early-exit in ~8-13 iters
RESID_TOL2 = 1.0e-6      # exit when ||G - I||_F^2 <= 1e-6; the update applied with that
                         # G squares the residual, far below the 1e-3 reference tolerance
_PREC = lax.Precision.HIGHEST   # pin the multi-pass f32 MXU path (numerics rely on it)


def _pinverse_kernel(a_ref, out_ref):
    a = a_ref[...].astype(jnp.float32)                   # (M, N)
    m, n = a.shape
    at = a.T                                             # (N, M); reused for x0 + matvecs

    # ---------------- scale estimate for X0 = alpha * A^T -----------------------
    abs_a = jnp.abs(a)
    col_sums = jnp.sum(abs_a, axis=0, keepdims=True)     # (1, N)
    norm_1 = jnp.max(col_sums)                           # max column sum
    norm_inf = jnp.max(jnp.sum(abs_a, axis=1))           # max row sum
    fro2 = jnp.sum(a * a)                                # ||A||_F^2
    u_bound = jnp.minimum(norm_1 * norm_inf, fro2)       # guaranteed >= sigma_max^2

    # Two power iterations on A^T A: l_est = ||A^T A v|| (||v||=1) <= sigma_max^2.
    # O(M*N) matvecs — negligible next to the O(min^2*max) iterations they save.
    v = col_sums / jnp.maximum(jnp.sqrt(jnp.sum(col_sums * col_sums)), 1e-30)
    l_est = jnp.float32(0.0)
    for _ in range(2):                                   # static unroll, tiny work
        w = jnp.dot(v, at, precision=_PREC, preferred_element_type=jnp.float32)  # (1, M)
        z = jnp.dot(w, a, precision=_PREC, preferred_element_type=jnp.float32)   # (1, N)
        zn = jnp.sqrt(jnp.sum(z * z))
        l_est = zn
        v = z / jnp.maximum(zn, 1e-30)

    # denom >= u_bound/1.9 >= sigma_max^2/1.9  =>  alpha*sigma_max^2 <= 1.9 < 2
    # (convergence guaranteed); an accurate l_est gives alpha ~= 1/sigma_max^2.
    denom = jnp.maximum(l_est, u_bound * jnp.float32(1.0 / 1.9))
    nonzero = u_bound > 0.0
    # pinv(0) == 0: guard against inf/NaN from an all-zero matrix.
    alpha = jnp.where(nonzero, 1.0 / jnp.where(nonzero, denom, 1.0), 0.0)
    x0 = alpha * at                                      # (N, M)

    # ------------- Newton–Schulz, Gram matrix on the small side -----------------
    #   N <= M : G = X A (N,N),  X <- (2I - G) X     4*N^2*M flops / iter
    #   M <  N : G = A X (M,M),  X <- X (2I - G)     4*M^2*N flops / iter
    gram_left = n <= m                                   # static, trace-time choice
    k = n if gram_left else m
    eye = jnp.eye(k, dtype=jnp.float32)                  # hoisted out of the loop

    def cond_fn(carry):
        i, _, r = carry
        return jnp.logical_and(i < MAX_ITERS, r > RESID_TOL2)

    def body_fn(carry):
        i, x, _ = carry
        if gram_left:
            g = jnp.dot(x, a, precision=_PREC, preferred_element_type=jnp.float32)   # (N, N)
        else:
            g = jnp.dot(a, x, precision=_PREC, preferred_element_type=jnp.float32)   # (M, M)
        d = eye - g                        # residual: G -> I for full-rank A
        r = jnp.sum(d * d)                 # ||G - I||_F^2, O(min^2) VPU reduction
        h = eye + d                        # H = 2I - G (folds the 2X into the small side)
        if gram_left:
            x_new = jnp.dot(h, x, precision=_PREC, preferred_element_type=jnp.float32)
        else:
            x_new = jnp.dot(x, h, precision=_PREC, preferred_element_type=jnp.float32)
        return i + 1, x_new, r

    r0 = jnp.where(nonzero, jnp.float32(jnp.inf), jnp.float32(0.0))  # zero matrix: skip loop
    _, x, _ = lax.while_loop(cond_fn, body_fn, (jnp.int32(0), x0, r0))
    out_ref[...] = x.astype(out_ref.dtype)


def _vmem_limit_bytes() -> int:
    # Raise the scoped-VMEM limit toward physical capacity so large resident matrices
    # compile; leave ~16 MiB headroom for Mosaic-internal scratch (v7x insurance).
    try:
        cap = pltpu.get_tpu_info().vmem_capacity_bytes
    except Exception:
        return 48 << 20                                   # safe on every generation
    return int(max(min(cap - (16 << 20), 100 << 20), 32 << 20))


def pinverse(z_p: jax.Array) -> jax.Array:
    """Moore–Penrose pseudoinverse of a 2-D matrix, computed in a Pallas kernel."""
    m, n = z_p.shape
    k, big = min(m, n), max(m, n)
    cost = pl.CostEstimate(
        flops=int(MAX_ITERS * 4 * k * k * big),
        transcendentals=0,
        bytes_accessed=int(2 * m * n * jnp.dtype(z_p.dtype).itemsize),
    )
    return pl.pallas_call(
        _pinverse_kernel,
        out_shape=jax.ShapeDtypeStruct((n, m), z_p.dtype),
        in_specs=[pl.BlockSpec(memory_space=pltpu.MemorySpace.VMEM)],
        out_specs=pl.BlockSpec(memory_space=pltpu.MemorySpace.VMEM),
        compiler_params=pltpu.CompilerParams(vmem_limit_bytes=_vmem_limit_bytes()),
        cost_estimate=cost,
    )(z_p)


if __name__ == "__main__":
    key = jax.random.PRNGKey(0)
    z_p = jax.random.normal(key, (16, 8), dtype=jnp.float32)

    out = pinverse(z_p)
    out = jax.block_until_ready(out)

    # silent correctness check against the SVD-based reference
    ref = jnp.linalg.pinv(z_p)
    if not jnp.allclose(out, ref, atol=1e-3, rtol=1e-3):
        raise AssertionError("Pallas pinverse does not match jnp.linalg.pinv")

    print("KERNEL_OK")
</pallas_src>

<mosaic_0001>
module attributes {stable_mosaic.version = 11 : i64} {
  func.func @_pinverse_kernel(%arg0: memref<16x8xf32, #tpu.memory_space<vmem>>, %arg1: memref<8x16xf32, #tpu.memory_space<vmem>>) attributes {dimension_semantics = [], scalar_prefetch = 0 : i64, scratch_operands = 0 : i64, tpu.core_type = #tpu.core_type<tc>} {
    %c0 = arith.constant 0 : index
    %c0_0 = arith.constant 0 : index
    %0 = vector.load %arg0[%c0, %c0_0] : memref<16x8xf32, #tpu.memory_space<vmem>>, vector<16x8xf32>
    %1 = tpu.transpose %0, [1, 0] : vector<16x8xf32> -> vector<8x16xf32>
    %2 = math.absf %0 : vector<16x8xf32>
    %cst = arith.constant dense<0.000000e+00> : vector<8xf32>
    %3 = vector.multi_reduction <add>, %2, %cst [0] : vector<16x8xf32> to vector<8xf32>
    %4 = vector.shape_cast %3 : vector<8xf32> to vector<1x8xf32>
    %5 = vector.shape_cast %4 : vector<1x8xf32> to vector<1x1x8xf32>
    %cst_1 = arith.constant dense<0xFF800000> : vector<1xf32>
    %6 = vector.multi_reduction <maximumf>, %5, %cst_1 [1, 2] : vector<1x1x8xf32> to vector<1xf32>
    %7 = vector.shape_cast %6 : vector<1xf32> to vector<1x1x1xf32>
    %8 = vector.extract %7[0, 0, 0] : f32 from vector<1x1x1xf32>
    %cst_2 = arith.constant dense<0.000000e+00> : vector<16xf32>
    %9 = vector.multi_reduction <add>, %2, %cst_2 [1] : vector<16x8xf32> to vector<16xf32>
    %10 = vector.shape_cast %9 : vector<16xf32> to vector<1x16xf32>
    %cst_3 = arith.constant dense<0xFF800000> : vector<1xf32>
    %11 = vector.multi_reduction <maximumf>, %10, %cst_3 [1] : vector<1x16xf32> to vector<1xf32>
    %12 = vector.shape_cast %11 : vector<1xf32> to vector<1x1xf32>
    %13 = vector.extract %12[0, 0] : f32 from vector<1x1xf32>
    %14 = arith.mulf %0, %0 : vector<16x8xf32>
    %15 = vector.shape_cast %14 : vector<16x8xf32> to vector<1x16x8xf32>
    %cst_4 = arith.constant dense<0.000000e+00> : vector<1xf32>
    %16 = vector.multi_reduction <add>, %15, %cst_4 [1, 2] : vector<1x16x8xf32> to vector<1xf32>
    %17 = vector.shape_cast %16 : vector<1xf32> to vector<1x1x1xf32>
    %18 = vector.extract %17[0, 0, 0] : f32 from vector<1x1x1xf32>
    %19 = arith.mulf %8, %13 : f32
    %20 = arith.minimumf %19, %18 : f32
    %21 = arith.mulf %4, %4 : vector<1x8xf32>
    %22 = vector.shape_cast %21 : vector<1x8xf32> to vector<1x1x8xf32>
    %cst_5 = arith.constant dense<0.000000e+00> : vector<1xf32>
    %23 = vector.multi_reduction <add>, %22, %cst_5 [1, 2] : vector<1x1x8xf32> to vector<1xf32>
    %24 = vector.shape_cast %23 : vector<1xf32> to vector<1x1x1xf32>
    %25 = vector.extract %24[0, 0, 0] : f32 from vector<1x1x1xf32>
    %26 = math.sqrt %25 : f32
    %cst_6 = arith.constant 1.000000e-30 : f32
    %27 = arith.maximumf %26, %cst_6 : f32
    %28 = vector.broadcast %27 : f32 to vector<1x8xf32>
    %29 = arith.divf %4, %28 : vector<1x8xf32>
    %cst_7 = arith.constant dense<0.000000e+00> : vector<1x16xf32>
    %30 = tpu.matmul %29, %1, %cst_7 {dimension_numbers = #tpu.dot_dimension_numbers<[1], [0], [0], [1], [0, 0, 1, 1], [], []>, precision = #tpu.contract_precision<fp32>} : vector<1x8xf32>, vector<8x16xf32>, vector<1x16xf32> -> vector<1x16xf32>
    %cst_8 = arith.constant dense<0.000000e+00> : vector<1x8xf32>
    %31 = tpu.matmul %30, %0, %cst_8 {dimension_numbers = #tpu.dot_dimension_numbers<[1], [0], [0], [1], [0, 0, 1, 1], [], []>, precision = #tpu.contract_precision<fp32>} : vector<1x16xf32>, vector<16x8xf32>, vector<1x8xf32> -> vector<1x8xf32>
    %32 = arith.mulf %31, %31 : vector<1x8xf32>
    %33 = vector.shape_cast %32 : vector<1x8xf32> to vector<1x1x8xf32>
    %cst_9 = arith.constant dense<0.000000e+00> : vector<1xf32>
    %34 = vector.multi_reduction <add>, %33, %cst_9 [1, 2] : vector<1x1x8xf32> to vector<1xf32>
    %35 = vector.shape_cast %34 : vector<1xf32> to vector<1x1x1xf32>
    %36 = vector.extract %35[0, 0, 0] : f32 from vector<1x1x1xf32>
    %37 = math.sqrt %36 : f32
    %cst_10 = arith.constant 1.000000e-30 : f32
    %38 = arith.maximumf %37, %cst_10 : f32
    %39 = vector.broadcast %38 : f32 to vector<1x8xf32>
    %40 = arith.divf %31, %39 : vector<1x8xf32>
    %cst_11 = arith.constant dense<0.000000e+00> : vector<1x16xf32>
    %41 = tpu.matmul %40, %1, %cst_11 {dimension_numbers = #tpu.dot_dimension_numbers<[1], [0], [0], [1], [0, 0, 1, 1], [], []>, precision = #tpu.contract_precision<fp32>} : vector<1x8xf32>, vector<8x16xf32>, vector<1x16xf32> -> vector<1x16xf32>
    %cst_12 = arith.constant dense<0.000000e+00> : vector<1x8xf32>
    %42 = tpu.matmul %41, %0, %cst_12 {dimension_numbers = #tpu.dot_dimension_numbers<[1], [0], [0], [1], [0, 0, 1, 1], [], []>, precision = #tpu.contract_precision<fp32>} : vector<1x16xf32>, vector<16x8xf32>, vector<1x8xf32> -> vector<1x8xf32>
    %43 = arith.mulf %42, %42 : vector<1x8xf32>
    %44 = vector.shape_cast %43 : vector<1x8xf32> to vector<1x1x8xf32>
    %cst_13 = arith.constant dense<0.000000e+00> : vector<1xf32>
    %45 = vector.multi_reduction <add>, %44, %cst_13 [1, 2] : vector<1x1x8xf32> to vector<1xf32>
    %46 = vector.shape_cast %45 : vector<1xf32> to vector<1x1x1xf32>
    %47 = vector.extract %46[0, 0, 0] : f32 from vector<1x1x1xf32>
    %48 = math.sqrt %47 : f32
    %cst_14 = arith.constant 0.526315808 : f32
    %49 = arith.mulf %20, %cst_14 : f32
    %50 = arith.maximumf %48, %49 : f32
    %cst_15 = arith.constant 0.000000e+00 : f32
    %51 = arith.cmpf ogt, %20, %cst_15 : f32
    %cst_16 = arith.constant 1.000000e+00 : f32
    %52 = arith.select %51, %50, %cst_16 : f32
    %cst_17 = arith.constant 1.000000e+00 : f32
    %53 = arith.divf %cst_17, %52 : f32
    %cst_18 = arith.constant 0.000000e+00 : f32
    %54 = arith.select %51, %53, %cst_18 : f32
    %55 = vector.broadcast %54 : f32 to vector<8x16xf32>
    %56 = arith.mulf %55, %1 : vector<8x16xf32>
    %57 = tpu.iota {dimensions = array<i32: 0>} : vector<8x8xi32>
    %58 = tpu.iota {dimensions = array<i32: 1>} : vector<8x8xi32>
    %c0_i32 = arith.constant 0 : i32
    %59 = vector.broadcast %c0_i32 : i32 to vector<8x8xi32>
    %60 = arith.addi %57, %59 : vector<8x8xi32>
    %61 = arith.cmpi eq, %60, %58 : vector<8x8xi32>
    %62 = arith.extui %61 : vector<8x8xi1> to vector<8x8xi32>
    %63 = arith.sitofp %62 : vector<8x8xi32> to vector<8x8xf32>
    %cst_19 = arith.constant 0x7F800000 : f32
    %cst_20 = arith.constant 0.000000e+00 : f32
    %64 = arith.select %51, %cst_19, %cst_20 : f32
    %c0_i32_21 = arith.constant 0 : i32
    %65:3 = scf.while (%arg2 = %c0_i32_21, %arg3 = %56, %arg4 = %64) : (i32, vector<8x16xf32>, f32) -> (i32, vector<8x16xf32>, f32) {
      %c20_i32 = arith.constant 20 : i32
      %67 = arith.cmpi slt, %arg2, %c20_i32 : i32
      %cst_24 = arith.constant 9.99999997E-7 : f32
      %68 = arith.cmpf ogt, %arg4, %cst_24 : f32
      %69 = arith.andi %67, %68 : i1
      scf.condition(%69) %arg2, %arg3, %arg4 : i32, vector<8x16xf32>, f32
    } do {
    ^bb0(%arg2: i32, %arg3: vector<8x16xf32>, %arg4: f32):
      %cst_24 = arith.constant dense<0.000000e+00> : vector<8x8xf32>
      %67 = tpu.matmul %arg3, %0, %cst_24 {dimension_numbers = #tpu.dot_dimension_numbers<[1], [0], [0], [1], [0, 0, 1, 1], [], []>, precision = #tpu.contract_precision<fp32>} : vector<8x16xf32>, vector<16x8xf32>, vector<8x8xf32> -> vector<8x8xf32>
      %68 = arith.subf %63, %67 : vector<8x8xf32>
      %69 = arith.mulf %68, %68 : vector<8x8xf32>
      %70 = vector.shape_cast %69 : vector<8x8xf32> to vector<1x8x8xf32>
      %cst_25 = arith.constant dense<0.000000e+00> : vector<1xf32>
      %71 = vector.multi_reduction <add>, %70, %cst_25 [1, 2] : vector<1x8x8xf32> to vector<1xf32>
      %72 = vector.shape_cast %71 : vector<1xf32> to vector<1x1x1xf32>
      %73 = vector.extract %72[0, 0, 0] : f32 from vector<1x1x1xf32>
      %74 = arith.addf %63, %68 : vector<8x8xf32>
      %cst_26 = arith.constant dense<0.000000e+00> : vector<8x16xf32>
      %75 = tpu.matmul %74, %arg3, %cst_26 {dimension_numbers = #tpu.dot_dimension_numbers<[1], [0], [0], [1], [0, 0, 1, 1], [], []>, precision = #tpu.contract_precision<fp32>} : vector<8x8xf32>, vector<8x16xf32>, vector<8x16xf32> -> vector<8x16xf32>
      %c1_i32 = arith.constant 1 : i32
      %76 = arith.addi %arg2, %c1_i32 : i32
      scf.yield %76, %75, %73 : i32, vector<8x16xf32>, f32
    }
    %c0_22 = arith.constant 0 : index
    %c0_23 = arith.constant 0 : index
    %66 = vector.load %arg1[%c0_22, %c0_23] : memref<8x16xf32, #tpu.memory_space<vmem>>, vector<8x16xf32>
    tpu.vector_store %arg1[%c0_22, %c0_23], %65#1 {strides = array<i32>} : memref<8x16xf32, #tpu.memory_space<vmem>>, vector<8x16xf32>,
    return
  }
}

</mosaic_0001>

<llo_original>
// kernel: tpu_custom_call.1
$region0: #{tpu_custom_call.1}
  #allocation0 [shape = 'u32[]', space=smem, size = 0x4, offset = 0x4, fixed_abs, tag = 'smem constant byte address 0x4 - core index']
  #allocation1 [shape = 'u32[144,128]{1,0:T(1,128)}', space=vmem, size = 0x12000, scoped, tag = 'internal scratch']
  %s0 = inlined_call_operand.vmem [shape: f32[16,8], index: 0, kind: input, shape index: {}]
  %s1 = inlined_call_operand.hbm [shape: f32[8,16], index: 1, kind: output, shape index: {}]
  %s2 = sld [smem:[#allocation0]]
  $region21: #{tpu_custom_call.1} parent=0
    _
  %s4 = ssub.s32 1, %s2
  %s5 = scalar_select 0, %s4, %s2
  $region1: #{tpu_custom_call.1} parent=0
    #allocation2 [shape = 'u8[4096]{0}', space=vmem, size = 0x1000, scoped, tag = 'output window, operand 0, single buffered']
    #allocation3 [shape = 's32[1]{0}', space=sflag, size = 0x4, scoped, tag = 'scoped memory for tpu_custom_call.1']
    %6 = vsyncpa [#allocation3], 0
    // Predicated region
    $region2: #{tpu_custom_call.1} parent=1 // pred_check
      _
    $region3: #{tpu_custom_call.1} parent=1 // pred_check_branch
      %8 = sbr.rel (0) target = $region5
    $region4: #{tpu_custom_call.1} parent=1 // pred_region
      _
    $region5: #{tpu_custom_call.1} parent=1 // pred_fallthru
      _
    %v9 = vld [vmem:[%s0] sm:$0xff]
    %v10 = vld [vmem:[%s0 + $0x8] sm:$0xff]
    %11 = vxpose.xlu0.b32.start [1/16] %v9, 128
    %12 = vxpose.xlu0.b32.cont [2/16] %v10, 128
    %13 = vxpose.xlu0.b32.cont [3/16] 0.0, 128
    %14 = vxpose.xlu0.b32.cont [4/16] 0.0, 128
    %15 = vxpose.xlu0.b32.cont [5/16] 0.0, 128
    %16 = vxpose.xlu0.b32.cont [6/16] 0.0, 128
    %17 = vxpose.xlu0.b32.cont [7/16] 0.0, 128
    %18 = vxpose.xlu0.b32.cont [8/16] 0.0, 128
    %19 = vxpose.xlu0.b32.cont [9/16] 0.0, 128
    %20 = vxpose.xlu0.b32.cont [10/16] 0.0, 128
    %21 = vxpose.xlu0.b32.cont [11/16] 0.0, 128
    %22 = vxpose.xlu0.b32.cont [12/16] 0.0, 128
    %23 = vxpose.xlu0.b32.cont [13/16] 0.0, 128
    %24 = vxpose.xlu0.b32.cont [14/16] 0.0, 128
    %25 = vxpose.xlu0.b32.cont [15/16] 0.0, 128
    %26 = vxpose.xlu0.b32.end [16/16] 0.0, 128
    %v27 = vpop.trf.xlu0
    %v28 = vpop.trf.xlu0
    %v29 = vpop.trf.xlu0
    %v30 = vpop.trf.xlu0
    %v31 = vpop.trf.xlu0
    %v32 = vpop.trf.xlu0
    %v33 = vpop.trf.xlu0
    %v34 = vpop.trf.xlu0
    %v35 = vpop.trf.xlu0
    %v36 = vpop.trf.xlu0
    %v37 = vpop.trf.xlu0
    %v38 = vpop.trf.xlu0
    %v39 = vpop.trf.xlu0
    %v40 = vpop.trf.xlu0
    %v41 = vpop.trf.xlu0
    %v42 = vpop.trf.xlu0
    %v43 = vand.u32 2147483647, %v9
    %v44 = vand.u32 2147483647, %v10
    %vm45 = vcmask 64512
    %v46 = vsel %vm45, %v43, 0.0
    %v47 = vsel %vm45, %v44, 0.0
    %v48 = vadd.f32 %v46, %v47
    %v49 = vrot.slane %v48, 4
    %v50 = vadd.f32 %v48, %v49
    %v51 = vrot.slane %v50, 2
    %v52 = vadd.f32 %v50, %v51
    %v53 = vrot.slane %v52, 1
    %v54 = vadd.f32 %v52, %v53
    %v55 = vsel %vm45, %v54, -inf
    %56 = vmax.xlane.f32.xlu0 %v55
    %v57 = vpop.xlane.xlu0 %56
    %s58 = vtos %v57
    %59 = vadd.xlane.f32.xlu0 %v46
    %v60 = vpop.xlane.xlu0 %59
    %61 = vadd.xlane.f32.xlu0 %v47
    %v62 = vpop.xlane.xlu0 %61
    %v63 = vmax.f32 %v60, %v62
    %v64 = vrot.slane %v63, 4
    %v65 = vmax.f32 %v63, %v64
    %v66 = vrot.slane %v65, 2
    %v67 = vmax.f32 %v65, %v66
    %v68 = vrot.slane %v67, 1
    %v69 = vmax.f32 %v67, %v68
    %s70 = vtos %v69
    %v71 = vmul.f32 %v9, %v9
    %v72 = vmul.f32 %v10, %v10
    %v73 = vsel %vm45, %v71, 0.0
    %v74 = vsel %vm45, %v72, 0.0
    %v75 = vadd.f32 %v73, %v74
    %76 = vadd.xlane.f32.xlu0 %v75
    %v77 = vpop.xlane.xlu0 %76
    %v78 = vrot.slane %v77, 4
    %v79 = vadd.f32 %v77, %v78
    %v80 = vrot.slane %v79, 2
    %v81 = vadd.f32 %v79, %v80
    %v82 = vrot.slane %v81, 1
    %v83 = vadd.f32 %v81, %v82
    %s84 = vtos %v83
    %s85 = smul.f32 %s58, %s70
    %s86 = smin.f32 %s85, %s84
    %v87 = vmul.f32 %v54, %v54
    %vm88 = vcmask 57344
    %v89 = vsel %vm88, %v87, 0.0
    %90 = vadd.xlane.f32.xlu0 %v89
    %v91 = vpop.xlane.xlu0 %90
    %v92 = vrot.slane %v91, 4
    %v93 = vadd.f32 %v91, %v92
    %v94 = vrot.slane %v93, 2
    %v95 = vadd.f32 %v93, %v94
    %v96 = vrot.slane %v95, 1
    %v97 = vadd.f32 %v95, %v96
    %s98 = vtos %v97
    %v99 = vstv %s98
    %v100 = vrsqrt.pop %v99
    %v101 = vmul.f32 %v99, %v100
    %vm102 = vcmp.eq.f32.partialorder %v99, inf
    %v103 = vsel %vm102, %v99, %v101
    %vm104 = vcmp.eq.f32.partialorder %v99, 0.0
    %v105 = vand.u32 %v99, 2147483648
    %v106 = vsel %vm104, %v105, %v103
    %s107 = vtos %v106
    %s108 = smax.f32 %s107, 1e-30
    %v109 = vstv %s108
    %v110 = vrcp.pop %v109
    %v111 = vmul.f32 %v54, %v110
    %v113 = vsel %vm45, %v111, 0
    %115 = vmatprep.subr.mxu0 0.0
    %116 = vmatpush1.msra.mxu0 0.0
    %117 = vmatprep.subr.mxu0 0.0
    %118 = vmatpush1.msra.mxu0 0.0
    %119 = vmatprep.subr.mxu0 0.0
    %120 = vmatpush1.msra.mxu0 0.0
    %121 = vmatprep.subr.mxu0 0.0
    %122 = vmatpush1.msra.mxu0 0.0
    %123 = vmatprep.subr.mxu0 0.0
    %124 = vmatpush1.msra.mxu0 0.0
    %125 = vmatprep.subr.mxu0 0.0
    %126 = vmatpush1.msra.mxu0 0.0
    %127 = vmatprep.subr.mxu0 0.0
    %128 = vmatpush1.msra.mxu0 0.0
    %129 = vmatprep.subr.mxu0 0.0
    %130 = vmatpush1.msra.mxu0 0.0
    %131 = vmatprep.subr.mxu0 0.0
    %132 = vmatpush1.msra.mxu0 0.0
    %133 = vmatprep.subr.mxu0 0.0
    %134 = vmatpush1.msra.mxu0 0.0
    %135 = vmatprep.subr.mxu0 0.0
    %136 = vmatpush1.msra.mxu0 0.0
    %137 = vmatprep.subr.mxu0 0.0
    %138 = vmatpush1.msra.mxu0 0.0
    %139 = vmatprep.subr.mxu0 0.0
    %140 = vmatpush1.msra.mxu0 0.0
    %141 = vmatprep.subr.mxu0 0.0
    %142 = vmatpush1.msra.mxu0 0.0
    %143 = vmatprep.subr.mxu0 0.0
    %144 = vmatpush1.msra.mxu0 0.0
    %145 = vmatprep.subr.mxu0 0.0
    %v146 = vand.u32 %v27, 4294901760
    %147 = vmatpush1.msra.mxu0 %v146
    %148 = vmatprep.subr.mxu0 0.0
    %149 = vmatpush2.msra.mxu0 0.0
    %150 = vmatprep.subr.mxu0 0.0
    %151 = vmatpush2.msra.mxu0 0.0
    %152 = vmatprep.subr.mxu0 0.0
    %153 = vmatpush2.msra.mxu0 0.0
    %154 = vmatprep.subr.mxu0 0.0
    %155 = vmatpush2.msra.mxu0 0.0
    %156 = vmatprep.subr.mxu0 0.0
    %157 = vmatpush2.msra.mxu0 0.0
    %158 = vmatprep.subr.mxu0 0.0
    %159 = vmatpush2.msra.mxu0 0.0
    %160 = vmatprep.subr.mxu0 0.0
    %161 = vmatpush2.msra.mxu0 0.0
    %162 = vmatprep.subr.mxu0 0.0
    %163 = vmatpush2.msra.mxu0 0.0
    %164 = vmatprep.subr.mxu0 0.0
    %165 = vmatpush2.msra.mxu0 0.0
    %166 = vmatprep.subr.mxu0 0.0
    %167 = vmatpush2.msra.mxu0 0.0
    %168 = vmatprep.subr.mxu0 0.0
    %169 = vmatpush2.msra.mxu0 0.0
    %170 = vmatprep.subr.mxu0 0.0
    %171 = vmatpush2.msra.mxu0 0.0
    %172 = vmatprep.subr.mxu0 0.0
    %173 = vmatpush2.msra.mxu0 0.0
    %174 = vmatprep.subr.mxu0 0.0
    %175 = vmatpush2.msra.mxu0 0.0
    %176 = vmatprep.subr.mxu0 0.0
    %177 = vmatpush2.msra.mxu0 0.0
    %178 = vmatprep.subr.mxu0 0.0
    %179 = vmatpush2.msra.mxu0 0.0
    %180 = vmatprep.mubr.f32.mxu0 0.0
    %v181 = vand.u32 %v113, 4294901760
    %v182 = vsub.f32 %v113, %v181
    %v183 = vand.u32 %v182, 4294901760
    %v184 = vsub.f32 %v182, %v183
    %v185 = vand.u32 %v184, 4294901760
    %186 = vmatmul.mubr.f32.gmra.mxu0 %v185
    %v187 = vpop.f32.mrf.mxu0
    %v188 = vadd.f32 0.0, %v187
    %v189 = vpop.f32.mrf.mxu0
    %190 = vdwg.mxu0
    %191 = vmatprep.subr.mxu0 0.0
    %192 = vmatpush1.msra.mxu0 0.0
    %193 = vmatprep.subr.mxu0 0.0
    %194 = vmatpush1.msra.mxu0 0.0
    %195 = vmatprep.subr.mxu0 0.0
    %196 = vmatpush1.msra.mxu0 0.0
    %197 = vmatprep.subr.mxu0 0.0
    %198 = vmatpush1.msra.mxu0 0.0
    %199 = vmatprep.subr.mxu0 0.0
    %200 = vmatpush1.msra.mxu0 0.0
    %201 = vmatprep.subr.mxu0 0.0
    %202 = vmatpush1.msra.mxu0 0.0
    %203 = vmatprep.subr.mxu0 0.0
    %204 = vmatpush1.msra.mxu0 0.0
    %205 = vmatprep.subr.mxu0 0.0
    %206 = vmatpush1.msra.mxu0 0.0
    %207 = vmatprep.subr.mxu0 0.0
    %208 = vmatpush1.msra.mxu0 0.0
    %209 = vmatprep.subr.mxu0 0.0
    %210 = vmatpush1.msra.mxu0 0.0
    %211 = vmatprep.subr.mxu0 0.0
    %212 = vmatpush1.msra.mxu0 0.0
    %213 = vmatprep.subr.mxu0 0.0
    %214 = vmatpush1.msra.mxu0 0.0
    %215 = vmatprep.subr.mxu0 0.0
    %216 = vmatpush1.msra.mxu0 0.0
    %217 = vmatprep.subr.mxu0 0.0
    %218 = vmatpush1.msra.mxu0 0.0
    %219 = vmatprep.subr.mxu0 0.0
    %220 = vmatpush1.msra.mxu0 0.0
    %221 = vmatprep.subr.mxu0 0.0
    %v222 = vand.u32 %v27, 4294901760
    %v223 = vsub.f32 %v27, %v222
    %v224 = vand.u32 %v223, 4294901760
    %v225 = vsub.f32 %v223, %v224
    %v226 = vand.u32 %v225, 4294901760
    %227 = vmatpush1.msra.mxu0 %v226
    %228 = vmatprep.subr.mxu0 0.0
    %229 = vmatpush2.msra.mxu0 0.0
    %230 = vmatprep.subr.mxu0 0.0
    %231 = vmatpush2.msra.mxu0 0.0
    %232 = vmatprep.subr.mxu0 0.0
    %233 = vmatpush2.msra.mxu0 0.0
    %234 = vmatprep.subr.mxu0 0.0
    %235 = vmatpush2.msra.mxu0 0.0
    %236 = vmatprep.subr.mxu0 0.0
    %237 = vmatpush2.msra.mxu0 0.0
    %238 = vmatprep.subr.mxu0 0.0
    %239 = vmatpush2.msra.mxu0 0.0
    %240 = vmatprep.subr.mxu0 0.0
    %241 = vmatpush2.msra.mxu0 0.0
    %242 = vmatprep.subr.mxu0 0.0
    %243 = vmatpush2.msra.mxu0 0.0
    %244 = vmatprep.subr.mxu0 0.0
    %245 = vmatpush2.msra.mxu0 0.0
    %246 = vmatprep.subr.mxu0 0.0
    %247 = vmatpush2.msra.mxu0 0.0
    %248 = vmatprep.subr.mxu0 0.0
    %249 = vmatpush2.msra.mxu0 0.0
    %250 = vmatprep.subr.mxu0 0.0
    %251 = vmatpush2.msra.mxu0 0.0
    %252 = vmatprep.subr.mxu0 0.0
    %253 = vmatpush2.msra.mxu0 0.0
    %254 = vmatprep.subr.mxu0 0.0
    %255 = vmatpush2.msra.mxu0 0.0
    %256 = vmatprep.subr.mxu0 0.0
    %257 = vmatpush2.msra.mxu0 0.0
    %258 = vmatprep.subr.mxu0 0.0
    %259 = vmatpush2.msra.mxu0 0.0
    %260 = vmatprep.mubr.f32.mxu0 0.0
    %v261 = vand.u32 %v113, 4294901760
    %262 = vmatmul.mubr.f32.gmra.mxu0 %v261
    %v263 = vpop.f32.mrf.mxu0
    %v264 = vadd.f32 %v188, %v263
    %v265 = vpop.f32.mrf.mxu0
    %266 = vdwg.mxu0
    %267 = vmatprep.subr.mxu0 0.0
    %268 = vmatpush1.msra.mxu0 0.0
    %269 = vmatprep.subr.mxu0 0.0
    %270 = vmatpush1.msra.mxu0 0.0
    %271 = vmatprep.subr.mxu0 0.0
    %272 = vmatpush1.msra.mxu0 0.0
    %273 = vmatprep.subr.mxu0 0.0
    %274 = vmatpush1.msra.mxu0 0.0
    %275 = vmatprep.subr.mxu0 0.0
    %276 = vmatpush1.msra.mxu0 0.0
    %277 = vmatprep.subr.mxu0 0.0
    %278 = vmatpush1.msra.mxu0 0.0
    %279 = vmatprep.subr.mxu0 0.0
    %280 = vmatpush1.msra.mxu0 0.0
    %281 = vmatprep.subr.mxu0 0.0
    %282 = vmatpush1.msra.mxu0 0.0
    %283 = vmatprep.subr.mxu0 0.0
    %284 = vmatpush1.msra.mxu0 0.0
    %285 = vmatprep.subr.mxu0 0.0
    %286 = vmatpush1.msra.mxu0 0.0
    %287 = vmatprep.subr.mxu0 0.0
    %288 = vmatpush1.msra.mxu0 0.0
    %289 = vmatprep.subr.mxu0 0.0
    %290 = vmatpush1.msra.mxu0 0.0
    %291 = vmatprep.subr.mxu0 0.0
    %292 = vmatpush1.msra.mxu0 0.0
    %293 = vmatprep.subr.mxu0 0.0
    %294 = vmatpush1.msra.mxu0 0.0
    %295 = vmatprep.subr.mxu0 0.0
    %296 = vmatpush1.msra.mxu0 0.0
    %297 = vmatprep.subr.mxu0 0.0
    %v298 = vand.u32 %v27, 4294901760
    %v299 = vsub.f32 %v27, %v298
    %300 = vmatpush1.msra.mxu0 %v299
    %301 = vmatprep.subr.mxu0 0.0
    %302 = vmatpush2.msra.mxu0 0.0
    %303 = vmatprep.subr.mxu0 0.0
    %304 = vmatpush2.msra.mxu0 0.0
    %305 = vmatprep.subr.mxu0 0.0
    %306 = vmatpush2.msra.mxu0 0.0
    %307 = vmatprep.subr.mxu0 0.0
    %308 = vmatpush2.msra.mxu0 0.0
    %309 = vmatprep.subr.mxu0 0.0
    %310 = vmatpush2.msra.mxu0 0.0
    %311 = vmatprep.subr.mxu0 0.0
    %312 = vmatpush2.msra.mxu0 0.0
    %313 = vmatprep.subr.mxu0 0.0
    %314 = vmatpush2.msra.mxu0 0.0
    %315 = vmatprep.subr.mxu0 0.0
    %316 = vmatpush2.msra.mxu0 0.0
    %317 = vmatprep.subr.mxu0 0.0
    %318 = vmatpush2.msra.mxu0 0.0
    %319 = vmatprep.subr.mxu0 0.0
    %320 = vmatpush2.msra.mxu0 0.0
    %321 = vmatprep.subr.mxu0 0.0
    %322 = vmatpush2.msra.mxu0 0.0
    %323 = vmatprep.subr.mxu0 0.0
    %324 = vmatpush2.msra.mxu0 0.0
    %325 = vmatprep.subr.mxu0 0.0
    %326 = vmatpush2.msra.mxu0 0.0
    %327 = vmatprep.subr.mxu0 0.0
    %328 = vmatpush2.msra.mxu0 0.0
    %329 = vmatprep.subr.mxu0 0.0
    %330 = vmatpush2.msra.mxu0 0.0
    %331 = vmatprep.subr.mxu0 0.0
    %332 = vmatpush2.msra.mxu0 0.0
    %333 = vmatprep.mubr.f32.mxu0 0.0
    %v334 = vand.u32 %v113, 4294901760
    %v335 = vsub.f32 %v113, %v334
    %336 = vmatmul.mubr.f32.gmra.mxu0 %v335
    %v337 = vpop.f32.mrf.mxu0
    %v338 = vadd.f32 %v264, %v337
    %v339 = vpop.f32.mrf.mxu0
    %340 = vdwg.mxu0
    %341 = vmatprep.subr.mxu0 0.0
    %342 = vmatpush1.msra.mxu0 0.0
    %343 = vmatprep.subr.mxu0 0.0
    %344 = vmatpush1.msra.mxu0 0.0
    %345 = vmatprep.subr.mxu0 0.0
    %346 = vmatpush1.msra.mxu0 0.0
    %347 = vmatprep.subr.mxu0 0.0
    %348 = vmatpush1.msra.mxu0 0.0
    %349 = vmatprep.subr.mxu0 0.0
    %350 = vmatpush1.msra.mxu0 0.0
    %351 = vmatprep.subr.mxu0 0.0
    %352 = vmatpush1.msra.mxu0 0.0
    %353 = vmatprep.subr.mxu0 0.0
    %354 = vmatpush1.msra.mxu0 0.0
    %355 = vmatprep.subr.mxu0 0.0
    %356 = vmatpush1.msra.mxu0 0.0
    %357 = vmatprep.subr.mxu0 0.0
    %358 = vmatpush1.msra.mxu0 0.0
    %359 = vmatprep.subr.mxu0 0.0
    %360 = vmatpush1.msra.mxu0 0.0
    %361 = vmatprep.subr.mxu0 0.0
    %362 = vmatpush1.msra.mxu0 0.0
    %363 = vmatprep.subr.mxu0 0.0
    %364 = vmatpush1.msra.mxu0 0.0
    %365 = vmatprep.subr.mxu0 0.0
    %366 = vmatpush1.msra.mxu0 0.0
    %367 = vmatprep.subr.mxu0 0.0
    %368 = vmatpush1.msra.mxu0 0.0
    %369 = vmatprep.subr.mxu0 0.0
    %370 = vmatpush1.msra.mxu0 0.0
    %371 = vmatprep.subr.mxu0 0.0
    %v372 = vand.u32 %v27, 4294901760
    %373 = vmatpush1.msra.mxu0 %v372
    %374 = vmatprep.subr.mxu0 0.0
    %375 = vmatpush2.msra.mxu0 0.0
    %376 = vmatprep.subr.mxu0 0.0
    %377 = vmatpush2.msra.mxu0 0.0
    %378 = vmatprep.subr.mxu0 0.0
    %379 = vmatpush2.msra.mxu0 0.0
    %380 = vmatprep.subr.mxu0 0.0
    %381 = vmatpush2.msra.mxu0 0.0
    %382 = vmatprep.subr.mxu0 0.0
    %383 = vmatpush2.msra.mxu0 0.0
    %384 = vmatprep.subr.mxu0 0.0
    %385 = vmatpush2.msra.mxu0 0.0
    %386 = vmatprep.subr.mxu0 0.0
    %387 = vmatpush2.msra.mxu0 0.0
    %388 = vmatprep.subr.mxu0 0.0
    %389 = vmatpush2.msra.mxu0 0.0
    %390 = vmatprep.subr.mxu0 0.0
    %391 = vmatpush2.msra.mxu0 0.0
    %392 = vmatprep.subr.mxu0 0.0
    %393 = vmatpush2.msra.mxu0 0.0
    %394 = vmatprep.subr.mxu0 0.0
    %395 = vmatpush2.msra.mxu0 0.0
    %396 = vmatprep.subr.mxu0 0.0
    %397 = vmatpush2.msra.mxu0 0.0
    %398 = vmatprep.subr.mxu0 0.0
    %399 = vmatpush2.msra.mxu0 0.0
    %400 = vmatprep.subr.mxu0 0.0
    %401 = vmatpush2.msra.mxu0 0.0
    %402 = vmatprep.subr.mxu0 0.0
    %403 = vmatpush2.msra.mxu0 0.0
    %404 = vmatprep.subr.mxu0 0.0
    %405 = vmatpush2.msra.mxu0 0.0
    %406 = vmatprep.mubr.f32.mxu0 0.0
    %v407 = vand.u32 %v113, 4294901760
    %v408 = vsub.f32 %v113, %v407
    %v409 = vand.u32 %v408, 4294901760
    %410 = vmatmul.mubr.f32.gmra.mxu0 %v409
    %v411 = vpop.f32.mrf.mxu0
    %v412 = vadd.f32 %v338, %v411
    %v413 = vpop.f32.mrf.mxu0
    %414 = vdwg.mxu0
    %415 = vmatprep.subr.mxu0 0.0
    %416 = vmatpush1.msra.mxu0 0.0
    %417 = vmatprep.subr.mxu0 0.0
    %418 = vmatpush1.msra.mxu0 0.0
    %419 = vmatprep.subr.mxu0 0.0
    %420 = vmatpush1.msra.mxu0 0.0
    %421 = vmatprep.subr.mxu0 0.0
    %422 = vmatpush1.msra.mxu0 0.0
    %423 = vmatprep.subr.mxu0 0.0
    %424 = vmatpush1.msra.mxu0 0.0
    %425 = vmatprep.subr.mxu0 0.0
    %426 = vmatpush1.msra.mxu0 0.0
    %427 = vmatprep.subr.mxu0 0.0
    %428 = vmatpush1.msra.mxu0 0.0
    %429 = vmatprep.subr.mxu0 0.0
    %430 = vmatpush1.msra.mxu0 0.0
    %431 = vmatprep.subr.mxu0 0.0
    %432 = vmatpush1.msra.mxu0 0.0
    %433 = vmatprep.subr.mxu0 0.0
    %434 = vmatpush1.msra.mxu0 0.0
    %435 = vmatprep.subr.mxu0 0.0
    %436 = vmatpush1.msra.mxu0 0.0
    %437 = vmatprep.subr.mxu0 0.0
    %438 = vmatpush1.msra.mxu0 0.0
    %439 = vmatprep.subr.mxu0 0.0
    %440 = vmatpush1.msra.mxu0 0.0
    %441 = vmatprep.subr.mxu0 0.0
    %442 = vmatpush1.msra.mxu0 0.0
    %443 = vmatprep.subr.mxu0 0.0
    %444 = vmatpush1.msra.mxu0 0.0
    %445 = vmatprep.subr.mxu0 0.0
    %v446 = vand.u32 %v27, 4294901760
    %v447 = vsub.f32 %v27, %v446
    %v448 = vand.u32 %v447, 4294901760
    %449 = vmatpush1.msra.mxu0 %v448
    %450 = vmatprep.subr.mxu0 0.0
    %451 = vmatpush2.msra.mxu0 0.0
    %452 = vmatprep.subr.mxu0 0.0
    %453 = vmatpush2.msra.mxu0 0.0
    %454 = vmatprep.subr.mxu0 0.0
    %455 = vmatpush2.msra.mxu0 0.0
    %456 = vmatprep.subr.mxu0 0.0
    %457 = vmatpush2.msra.mxu0 0.0
    %458 = vmatprep.subr.mxu0 0.0
    %459 = vmatpush2.msra.mxu0 0.0
    %460 = vmatprep.subr.mxu0 0.0
    %461 = vmatpush2.msra.mxu0 0.0
    %462 = vmatprep.subr.mxu0 0.0
    %463 = vmatpush2.msra.mxu0 0.0
    %464 = vmatprep.subr.mxu0 0.0
    %465 = vmatpush2.msra.mxu0 0.0
    %466 = vmatprep.subr.mxu0 0.0
    %467 = vmatpush2.msra.mxu0 0.0
    %468 = vmatprep.subr.mxu0 0.0
    %469 = vmatpush2.msra.mxu0 0.0
    %470 = vmatprep.subr.mxu0 0.0
    %471 = vmatpush2.msra.mxu0 0.0
    %472 = vmatprep.subr.mxu0 0.0
    %473 = vmatpush2.msra.mxu0 0.0
    %474 = vmatprep.subr.mxu0 0.0
    %475 = vmatpush2.msra.mxu0 0.0
    %476 = vmatprep.subr.mxu0 0.0
    %477 = vmatpush2.msra.mxu0 0.0
    %478 = vmatprep.subr.mxu0 0.0
    %479 = vmatpush2.msra.mxu0 0.0
    %480 = vmatprep.subr.mxu0 0.0
    %481 = vmatpush2.msra.mxu0 0.0
    %482 = vmatprep.mubr.f32.mxu0 0.0
    %v483 = vand.u32 %v113, 4294901760
    %484 = vmatmul.mubr.f32.gmra.mxu0 %v483
    %v485 = vpop.f32.mrf.mxu0
    %v486 = vadd.f32 %v412, %v485
    %v487 = vpop.f32.mrf.mxu0
    %488 = vdwg.mxu0
    %489 = vmatprep.subr.mxu0 0.0
    %490 = vmatpush1.msra.mxu0 0.0
    %491 = vmatprep.subr.mxu0 0.0
    %492 = vmatpush1.msra.mxu0 0.0
    %493 = vmatprep.subr.mxu0 0.0
    %494 = vmatpush1.msra.mxu0 0.0
    %495 = vmatprep.subr.mxu0 0.0
    %496 = vmatpush1.msra.mxu0 0.0
    %497 = vmatprep.subr.mxu0 0.0
    %498 = vmatpush1.msra.mxu0 0.0
    %499 = vmatprep.subr.mxu0 0.0
    %500 = vmatpush1.msra.mxu0 0.0
    %501 = vmatprep.subr.mxu0 0.0
    %502 = vmatpush1.msra.mxu0 0.0
    %503 = vmatprep.subr.mxu0 0.0
    %504 = vmatpush1.msra.mxu0 0.0
    %505 = vmatprep.subr.mxu0 0.0
    %506 = vmatpush1.msra.mxu0 0.0
    %507 = vmatprep.subr.mxu0 0.0
    %508 = vmatpush1.msra.mxu0 0.0
    %509 = vmatprep.subr.mxu0 0.0
    %510 = vmatpush1.msra.mxu0 0.0
    %511 = vmatprep.subr.mxu0 0.0
    %512 = vmatpush1.msra.mxu0 0.0
    %513 = vmatprep.subr.mxu0 0.0
    %514 = vmatpush1.msra.mxu0 0.0
    %515 = vmatprep.subr.mxu0 0.0
    %516 = vmatpush1.msra.mxu0 0.0
    %517 = vmatprep.subr.mxu0 0.0
    %518 = vmatpush1.msra.mxu0 0.0
    %519 = vmatprep.subr.mxu0 0.0
    %v520 = vand.u32 %v27, 4294901760
    %521 = vmatpush1.msra.mxu0 %v520
    %522 = vmatprep.subr.mxu0 0.0
    %523 = vmatpush2.msra.mxu0 0.0
    %524 = vmatprep.subr.mxu0 0.0
    %525 = vmatpush2.msra.mxu0 0.0
    %526 = vmatprep.subr.mxu0 0.0
    %527 = vmatpush2.msra.mxu0 0.0
    %528 = vmatprep.subr.mxu0 0.0
    %529 = vmatpush2.msra.mxu0 0.0
    %530 = vmatprep.subr.mxu0 0.0
    %531 = vmatpush2.msra.mxu0 0.0
    %532 = vmatprep.subr.mxu0 0.0
    %533 = vmatpush2.msra.mxu0 0.0
    %534 = vmatprep.subr.mxu0 0.0
    %535 = vmatpush2.msra.mxu0 0.0
    %536 = vmatprep.subr.mxu0 0.0
    %537 = vmatpush2.msra.mxu0 0.0
    %538 = vmatprep.subr.mxu0 0.0
    %539 = vmatpush2.msra.mxu0 0.0
    %540 = vmatprep.subr.mxu0 0.0
    %541 = vmatpush2.msra.mxu0 0.0
    %542 = vmatprep.subr.mxu0 0.0
    %543 = vmatpush2.msra.mxu0 0.0
    %544 = vmatprep.subr.mxu0 0.0
    %545 = vmatpush2.msra.mxu0 0.0
    %546 = vmatprep.subr.mxu0 0.0
    %547 = vmatpush2.msra.mxu0 0.0
    %548 = vmatprep.subr.mxu0 0.0
    %549 = vmatpush2.msra.mxu0 0.0
    %550 = vmatprep.subr.mxu0 0.0
    %551 = vmatpush2.msra.mxu0 0.0
    %552 = vmatprep.subr.mxu0 0.0
    %553 = vmatpush2.msra.mxu0 0.0
    %554 = vmatprep.mubr.f32.mxu0 0.0
    %v555 = vand.u32 %v113, 4294901760
    %556 = vmatmul.mubr.f32.gmra.mxu0 %v555
    %v557 = vpop.f32.mrf.mxu0
    %v558 = vadd.f32 %v486, %v557
    %v559 = vpop.f32.mrf.mxu0
    %560 = vdwg.mxu0
    %vm561 = vcmask 130048
    %v563 = vsel %vm561, %v558, 0
    %565 = vmatprep.subr.mxu0 0.0
    %566 = vmatpush1.msra.mxu0 0.0
    %567 = vmatprep.subr.mxu0 0.0
    %568 = vmatpush1.msra.mxu0 0.0
    %569 = vmatprep.subr.mxu0 0.0
    %570 = vmatpush1.msra.mxu0 0.0
    %571 = vmatprep.subr.mxu0 0.0
    %572 = vmatpush1.msra.mxu0 0.0
    %573 = vmatprep.subr.mxu0 0.0
    %574 = vmatpush1.msra.mxu0 0.0
    %575 = vmatprep.subr.mxu0 0.0
    %576 = vmatpush1.msra.mxu0 0.0
    %577 = vmatprep.subr.mxu0 0.0
    %578 = vmatpush1.msra.mxu0 0.0
    %579 = vmatprep.subr.mxu0 0.0
    %580 = vmatpush1.msra.mxu0 0.0
    %581 = vmatprep.subr.mxu0 0.0
    %582 = vmatpush1.msra.mxu0 0.0
    %583 = vmatprep.subr.mxu0 0.0
    %584 = vmatpush1.msra.mxu0 0.0
    %585 = vmatprep.subr.mxu0 0.0
    %586 = vmatpush1.msra.mxu0 0.0
    %587 = vmatprep.subr.mxu0 0.0
    %588 = vmatpush1.msra.mxu0 0.0
    %589 = vmatprep.subr.mxu0 0.0
    %590 = vmatpush1.msra.mxu0 0.0
    %591 = vmatprep.subr.mxu0 0.0
    %592 = vmatpush1.msra.mxu0 0.0
    %593 = vmatprep.subr.mxu0 0.0
    %v594 = vand.u32 %v10, 4294901760
    %595 = vmatpush1.msra.mxu0 %v594
    %596 = vmatprep.subr.mxu0 0.0
    %v597 = vand.u32 %v9, 4294901760
    %598 = vmatpush1.msra.mxu0 %v597
    %599 = vmatprep.subr.mxu0 0.0
    %600 = vmatpush2.msra.mxu0 0.0
    %601 = vmatprep.subr.mxu0 0.0
    %602 = vmatpush2.msra.mxu0 0.0
    %603 = vmatprep.subr.mxu0 0.0
    %604 = vmatpush2.msra.mxu0 0.0
    %605 = vmatprep.subr.mxu0 0.0
    %606 = vmatpush2.msra.mxu0 0.0
    %607 = vmatprep.subr.mxu0 0.0
    %608 = vmatpush2.msra.mxu0 0.0
    %609 = vmatprep.subr.mxu0 0.0
    %610 = vmatpush2.msra.mxu0 0.0
    %611 = vmatprep.subr.mxu0 0.0
    %612 = vmatpush2.msra.mxu0 0.0
    %613 = vmatprep.subr.mxu0 0.0
    %614 = vmatpush2.msra.mxu0 0.0
    %615 = vmatprep.subr.mxu0 0.0
    %616 = vmatpush2.msra.mxu0 0.0
    %617 = vmatprep.subr.mxu0 0.0
    %618 = vmatpush2.msra.mxu0 0.0
    %619 = vmatprep.subr.mxu0 0.0
    %620 = vmatpush2.msra.mxu0 0.0
    %621 = vmatprep.subr.mxu0 0.0
    %622 = vmatpush2.msra.mxu0 0.0
    %623 = vmatprep.subr.mxu0 0.0
    %624 = vmatpush2.msra.mxu0 0.0
    %625 = vmatprep.subr.mxu0 0.0
    %626 = vmatpush2.msra.mxu0 0.0
    %627 = vmatprep.subr.mxu0 0.0
    %628 = vmatpush2.msra.mxu0 0.0
    %629 = vmatprep.subr.mxu0 0.0
    %630 = vmatpush2.msra.mxu0 0.0
    %631 = vmatprep.mubr.f32.mxu0 0.0
    %v632 = vand.u32 %v563, 4294901760
    %v633 = vsub.f32 %v563, %v632
    %v634 = vand.u32 %v633, 4294901760
    %v635 = vsub.f32 %v633, %v634
    %v636 = vand.u32 %v635, 4294901760
    %637 = vmatmul.mubr.f32.gmra.mxu0 %v636
    %v638 = vpop.f32.mrf.mxu0
    %v639 = vadd.f32 0.0, %v638
    %v640 = vpop.f32.mrf.mxu0
    %641 = vdwg.mxu0
    %642 = vmatprep.subr.mxu0 0.0
    %643 = vmatpush1.msra.mxu0 0.0
    %644 = vmatprep.subr.mxu0 0.0
    %645 = vmatpush1.msra.mxu0 0.0
    %646 = vmatprep.subr.mxu0 0.0
    %647 = vmatpush1.msra.mxu0 0.0
    %648 = vmatprep.subr.mxu0 0.0
    %649 = vmatpush1.msra.mxu0 0.0
    %650 = vmatprep.subr.mxu0 0.0
    %651 = vmatpush1.msra.mxu0 0.0
    %652 = vmatprep.subr.mxu0 0.0
    %653 = vmatpush1.msra.mxu0 0.0
    %654 = vmatprep.subr.mxu0 0.0
    %655 = vmatpush1.msra.mxu0 0.0
    %656 = vmatprep.subr.mxu0 0.0
    %657 = vmatpush1.msra.mxu0 0.0
    %658 = vmatprep.subr.mxu0 0.0
    %659 = vmatpush1.msra.mxu0 0.0
    %660 = vmatprep.subr.mxu0 0.0
    %661 = vmatpush1.msra.mxu0 0.0
    %662 = vmatprep.subr.mxu0 0.0
    %663 = vmatpush1.msra.mxu0 0.0
    %664 = vmatprep.subr.mxu0 0.0
    %665 = vmatpush1.msra.mxu0 0.0
    %666 = vmatprep.subr.mxu0 0.0
    %667 = vmatpush1.msra.mxu0 0.0
    %668 = vmatprep.subr.mxu0 0.0
    %669 = vmatpush1.msra.mxu0 0.0
    %670 = vmatprep.subr.mxu0 0.0
    %v671 = vand.u32 %v10, 4294901760
    %v672 = vsub.f32 %v10, %v671
    %v673 = vand.u32 %v672, 4294901760
    %v674 = vsub.f32 %v672, %v673
    %v675 = vand.u32 %v674, 4294901760
    %676 = vmatpush1.msra.mxu0 %v675
    %677 = vmatprep.subr.mxu0 0.0
    %v678 = vand.u32 %v9, 4294901760
    %v679 = vsub.f32 %v9, %v678
    %v680 = vand.u32 %v679, 4294901760
    %v681 = vsub.f32 %v679, %v680
    %v682 = vand.u32 %v681, 4294901760
    %683 = vmatpush1.msra.mxu0 %v682
    %684 = vmatprep.subr.mxu0 0.0
    %685 = vmatpush2.msra.mxu0 0.0
    %686 = vmatprep.subr.mxu0 0.0
    %687 = vmatpush2.msra.mxu0 0.0
    %688 = vmatprep.subr.mxu0 0.0
    %689 = vmatpush2.msra.mxu0 0.0
    %690 = vmatprep.subr.mxu0 0.0
    %691 = vmatpush2.msra.mxu0 0.0
    %692 = vmatprep.subr.mxu0 0.0
    %693 = vmatpush2.msra.mxu0 0.0
    %694 = vmatprep.subr.mxu0 0.0
    %695 = vmatpush2.msra.mxu0 0.0
    %696 = vmatprep.subr.mxu0 0.0
    %697 = vmatpush2.msra.mxu0 0.0
    %698 = vmatprep.subr.mxu0 0.0
    %699 = vmatpush2.msra.mxu0 0.0
    %700 = vmatprep.subr.mxu0 0.0
    %701 = vmatpush2.msra.mxu0 0.0
    %702 = vmatprep.subr.mxu0 0.0
    %703 = vmatpush2.msra.mxu0 0.0
    %704 = vmatprep.subr.mxu0 0.0
    %705 = vmatpush2.msra.mxu0 0.0
    %706 = vmatprep.subr.mxu0 0.0
    %707 = vmatpush2.msra.mxu0 0.0
    %708 = vmatprep.subr.mxu0 0.0
    %709 = vmatpush2.msra.mxu0 0.0
    %710 = vmatprep.subr.mxu0 0.0
    %711 = vmatpush2.msra.mxu0 0.0
    %712 = vmatprep.subr.mxu0 0.0
    %713 = vmatpush2.msra.mxu0 0.0
    %714 = vmatprep.subr.mxu0 0.0
    %715 = vmatpush2.msra.mxu0 0.0
    %716 = vmatprep.mubr.f32.mxu0 0.0
    %v717 = vand.u32 %v563, 4294901760
    %718 = vmatmul.mubr.f32.gmra.mxu0 %v717
    %v719 = vpop.f32.mrf.mxu0
    %v720 = vadd.f32 %v639, %v719
    %v721 = vpop.f32.mrf.mxu0
    %722 = vdwg.mxu0
    %723 = vmatprep.subr.mxu0 0.0
    %724 = vmatpush1.msra.mxu0 0.0
    %725 = vmatprep.subr.mxu0 0.0
    %726 = vmatpush1.msra.mxu0 0.0
    %727 = vmatprep.subr.mxu0 0.0
    %728 = vmatpush1.msra.mxu0 0.0
    %729 = vmatprep.subr.mxu0 0.0
    %730 = vmatpush1.msra.mxu0 0.0
    %731 = vmatprep.subr.mxu0 0.0
    %732 = vmatpush1.msra.mxu0 0.0
    %733 = vmatprep.subr.mxu0 0.0
    %734 = vmatpush1.msra.mxu0 0.0
    %735 = vmatprep.subr.mxu0 0.0
    %736 = vmatpush1.msra.mxu0 0.0
    %737 = vmatprep.subr.mxu0 0.0
    %738 = vmatpush1.msra.mxu0 0.0
    %739 = vmatprep.subr.mxu0 0.0
    %740 = vmatpush1.msra.mxu0 0.0
    %741 = vmatprep.subr.mxu0 0.0
    %742 = vmatpush1.msra.mxu0 0.0
    %743 = vmatprep.subr.mxu0 0.0
    %744 = vmatpush1.msra.mxu0 0.0
    %745 = vmatprep.subr.mxu0 0.0
    %746 = vmatpush1.msra.mxu0 0.0
    %747 = vmatprep.subr.mxu0 0.0
    %748 = vmatpush1.msra.mxu0 0.0
    %749 = vmatprep.subr.mxu0 0.0
    %750 = vmatpush1.msra.mxu0 0.0
    %751 = vmatprep.subr.mxu0 0.0
    %v752 = vand.u32 %v10, 4294901760
    %v753 = vsub.f32 %v10, %v752
    %754 = vmatpush1.msra.mxu0 %v753
    %755 = vmatprep.subr.mxu0 0.0
    %v756 = vand.u32 %v9, 4294901760
    %v757 = vsub.f32 %v9, %v756
    %758 = vmatpush1.msra.mxu0 %v757
    %759 = vmatprep.subr.mxu0 0.0
    %760 = vmatpush2.msra.mxu0 0.0
    %761 = vmatprep.subr.mxu0 0.0
    %762 = vmatpush2.msra.mxu0 0.0
    %763 = vmatprep.subr.mxu0 0.0
    %764 = vmatpush2.msra.mxu0 0.0
    %765 = vmatprep.subr.mxu0 0.0
    %766 = vmatpush2.msra.mxu0 0.0
    %767 = vmatprep.subr.mxu0 0.0
    %768 = vmatpush2.msra.mxu0 0.0
    %769 = vmatprep.subr.mxu0 0.0
    %770 = vmatpush2.msra.mxu0 0.0
    %771 = vmatprep.subr.mxu0 0.0
    %772 = vmatpush2.msra.mxu0 0.0
    %773 = vmatprep.subr.mxu0 0.0
    %774 = vmatpush2.msra.mxu0 0.0
    %775 = vmatprep.subr.mxu0 0.0
    %776 = vmatpush2.msra.mxu0 0.0
    %777 = vmatprep.subr.mxu0 0.0
    %778 = vmatpush2.msra.mxu0 0.0
    %779 = vmatprep.subr.mxu0 0.0
    %780 = vmatpush2.msra.mxu0 0.0
    %781 = vmatprep.subr.mxu0 0.0
    %782 = vmatpush2.msra.mxu0 0.0
    %783 = vmatprep.subr.mxu0 0.0
    %784 = vmatpush2.msra.mxu0 0.0
    %785 = vmatprep.subr.mxu0 0.0
    %786 = vmatpush2.msra.mxu0 0.0
    %787 = vmatprep.subr.mxu0 0.0
    %788 = vmatpush2.msra.mxu0 0.0
    %789 = vmatprep.subr.mxu0 0.0
    %790 = vmatpush2.msra.mxu0 0.0
    %791 = vmatprep.mubr.f32.mxu0 0.0
    %v792 = vand.u32 %v563, 4294901760
    %v793 = vsub.f32 %v563, %v792
    %794 = vmatmul.mubr.f32.gmra.mxu0 %v793
    %v795 = vpop.f32.mrf.mxu0
    %v796 = vadd.f32 %v720, %v795
    %v797 = vpop.f32.mrf.mxu0
    %798 = vdwg.mxu0
    %799 = vmatprep.subr.mxu0 0.0
    %800 = vmatpush1.msra.mxu0 0.0
    %801 = vmatprep.subr.mxu0 0.0
    %802 = vmatpush1.msra.mxu0 0.0
    %803 = vmatprep.subr.mxu0 0.0
    %804 = vmatpush1.msra.mxu0 0.0
    %805 = vmatprep.subr.mxu0 0.0
    %806 = vmatpush1.msra.mxu0 0.0
    %807 = vmatprep.subr.mxu0 0.0
    %808 = vmatpush1.msra.mxu0 0.0
    %809 = vmatprep.subr.mxu0 0.0
    %810 = vmatpush1.msra.mxu0 0.0
    %811 = vmatprep.subr.mxu0 0.0
    %812 = vmatpush1.msra.mxu0 0.0
    %813 = vmatprep.subr.mxu0 0.0
    %814 = vmatpush1.msra.mxu0 0.0
    %815 = vmatprep.subr.mxu0 0.0
    %816 = vmatpush1.msra.mxu0 0.0
    %817 = vmatprep.subr.mxu0 0.0
    %818 = vmatpush1.msra.mxu0 0.0
    %819 = vmatprep.subr.mxu0 0.0
    %820 = vmatpush1.msra.mxu0 0.0
    %821 = vmatprep.subr.mxu0 0.0
    %822 = vmatpush1.msra.mxu0 0.0
    %823 = vmatprep.subr.mxu0 0.0
    %824 = vmatpush1.msra.mxu0 0.0
    %825 = vmatprep.subr.mxu0 0.0
    %826 = vmatpush1.msra.mxu0 0.0
    %827 = vmatprep.subr.mxu0 0.0
    %v828 = vand.u32 %v10, 4294901760
    %829 = vmatpush1.msra.mxu0 %v828
    %830 = vmatprep.subr.mxu0 0.0
    %v831 = vand.u32 %v9, 4294901760
    %832 = vmatpush1.msra.mxu0 %v831
    %833 = vmatprep.subr.mxu0 0.0
    %834 = vmatpush2.msra.mxu0 0.0
    %835 = vmatprep.subr.mxu0 0.0
    %836 = vmatpush2.msra.mxu0 0.0
    %837 = vmatprep.subr.mxu0 0.0
    %838 = vmatpush2.msra.mxu0 0.0
    %839 = vmatprep.subr.mxu0 0.0
    %840 = vmatpush2.msra.mxu0 0.0
    %841 = vmatprep.subr.mxu0 0.0
    %842 = vmatpush2.msra.mxu0 0.0
    %843 = vmatprep.subr.mxu0 0.0
    %844 = vmatpush2.msra.mxu0 0.0
    %845 = vmatprep.subr.mxu0 0.0
    %846 = vmatpush2.msra.mxu0 0.0
    %847 = vmatprep.subr.mxu0 0.0
    %848 = vmatpush2.msra.mxu0 0.0
    %849 = vmatprep.subr.mxu0 0.0
    %850 = vmatpush2.msra.mxu0 0.0
    %851 = vmatprep.subr.mxu0 0.0
    %852 = vmatpush2.msra.mxu0 0.0
    %853 = vmatprep.subr.mxu0 0.0
    %854 = vmatpush2.msra.mxu0 0.0
    %855 = vmatprep.subr.mxu0 0.0
    %856 = vmatpush2.msra.mxu0 0.0
    %857 = vmatprep.subr.mxu0 0.0
    %858 = vmatpush2.msra.mxu0 0.0
    %859 = vmatprep.subr.mxu0 0.0
    %860 = vmatpush2.msra.mxu0 0.0
    %861 = vmatprep.subr.mxu0 0.0
    %862 = vmatpush2.msra.mxu0 0.0
    %863 = vmatprep.subr.mxu0 0.0
    %864 = vmatpush2.msra.mxu0 0.0
    %865 = vmatprep.mubr.f32.mxu0 0.0
    %v866 = vand.u32 %v563, 4294901760
    %v867 = vsub.f32 %v563, %v866
    %v868 = vand.u32 %v867, 4294901760
    %869 = vmatmul.mubr.f32.gmra.mxu0 %v868
    %v870 = vpop.f32.mrf.mxu0
    %v871 = vadd.f32 %v796, %v870
    %v872 = vpop.f32.mrf.mxu0
    %873 = vdwg.mxu0
    %874 = vmatprep.subr.mxu0 0.0
    %875 = vmatpush1.msra.mxu0 0.0
    %876 = vmatprep.subr.mxu0 0.0
    %877 = vmatpush1.msra.mxu0 0.0
    %878 = vmatprep.subr.mxu0 0.0
    %879 = vmatpush1.msra.mxu0 0.0
    %880 = vmatprep.subr.mxu0 0.0
    %881 = vmatpush1.msra.mxu0 0.0
    %882 = vmatprep.subr.mxu0 0.0
    %883 = vmatpush1.msra.mxu0 0.0
    %884 = vmatprep.subr.mxu0 0.0
    %885 = vmatpush1.msra.mxu0 0.0
    %886 = vmatprep.subr.mxu0 0.0
    %887 = vmatpush1.msra.mxu0 0.0
    %888 = vmatprep.subr.mxu0 0.0
    %889 = vmatpush1.msra.mxu0 0.0
    %890 = vmatprep.subr.mxu0 0.0
    %891 = vmatpush1.msra.mxu0 0.0
    %892 = vmatprep.subr.mxu0 0.0
    %893 = vmatpush1.msra.mxu0 0.0
    %894 = vmatprep.subr.mxu0 0.0
    %895 = vmatpush1.msra.mxu0 0.0
    %896 = vmatprep.subr.mxu0 0.0
    %897 = vmatpush1.msra.mxu0 0.0
    %898 = vmatprep.subr.mxu0 0.0
    %899 = vmatpush1.msra.mxu0 0.0
    %900 = vmatprep.subr.mxu0 0.0
    %901 = vmatpush1.msra.mxu0 0.0
    %902 = vmatprep.subr.mxu0 0.0
    %v903 = vand.u32 %v10, 4294901760
    %v904 = vsub.f32 %v10, %v903
    %v905 = vand.u32 %v904, 4294901760
    %906 = vmatpush1.msra.mxu0 %v905
    %907 = vmatprep.subr.mxu0 0.0
    %v908 = vand.u32 %v9, 4294901760
    %v909 = vsub.f32 %v9, %v908
    %v910 = vand.u32 %v909, 4294901760
    %911 = vmatpush1.msra.mxu0 %v910
    %912 = vmatprep.subr.mxu0 0.0
    %913 = vmatpush2.msra.mxu0 0.0
    %914 = vmatprep.subr.mxu0 0.0
    %915 = vmatpush2.msra.mxu0 0.0
    %916 = vmatprep.subr.mxu0 0.0
    %917 = vmatpush2.msra.mxu0 0.0
    %918 = vmatprep.subr.mxu0 0.0
    %919 = vmatpush2.msra.mxu0 0.0
    %920 = vmatprep.subr.mxu0 0.0
    %921 = vmatpush2.msra.mxu0 0.0
    %922 = vmatprep.subr.mxu0 0.0
    %923 = vmatpush2.msra.mxu0 0.0
    %924 = vmatprep.subr.mxu0 0.0
    %925 = vmatpush2.msra.mxu0 0.0
    %926 = vmatprep.subr.mxu0 0.0
    %927 = vmatpush2.msra.mxu0 0.0
    %928 = vmatprep.subr.mxu0 0.0
    %929 = vmatpush2.msra.mxu0 0.0
    %930 = vmatprep.subr.mxu0 0.0
    %931 = vmatpush2.msra.mxu0 0.0
    %932 = vmatprep.subr.mxu0 0.0
    %933 = vmatpush2.msra.mxu0 0.0
    %934 = vmatprep.subr.mxu0 0.0
    %935 = vmatpush2.msra.mxu0 0.0
    %936 = vmatprep.subr.mxu0 0.0
    %937 = vmatpush2.msra.mxu0 0.0
    %938 = vmatprep.subr.mxu0 0.0
    %939 = vmatpush2.msra.mxu0 0.0
    %940 = vmatprep.subr.mxu0 0.0
    %941 = vmatpush2.msra.mxu0 0.0
    %942 = vmatprep.subr.mxu0 0.0
    %943 = vmatpush2.msra.mxu0 0.0
    %944 = vmatprep.mubr.f32.mxu0 0.0
    %v945 = vand.u32 %v563, 4294901760
    %946 = vmatmul.mubr.f32.gmra.mxu0 %v945
    %v947 = vpop.f32.mrf.mxu0
    %v948 = vadd.f32 %v871, %v947
    %v949 = vpop.f32.mrf.mxu0
    %950 = vdwg.mxu0
    %951 = vmatprep.subr.mxu0 0.0
    %952 = vmatpush1.msra.mxu0 0.0
    %953 = vmatprep.subr.mxu0 0.0
    %954 = vmatpush1.msra.mxu0 0.0
    %955 = vmatprep.subr.mxu0 0.0
    %956 = vmatpush1.msra.mxu0 0.0
    %957 = vmatprep.subr.mxu0 0.0
    %958 = vmatpush1.msra.mxu0 0.0
    %959 = vmatprep.subr.mxu0 0.0
    %960 = vmatpush1.msra.mxu0 0.0
    %961 = vmatprep.subr.mxu0 0.0
    %962 = vmatpush1.msra.mxu0 0.0
    %963 = vmatprep.subr.mxu0 0.0
    %964 = vmatpush1.msra.mxu0 0.0
    %965 = vmatprep.subr.mxu0 0.0
    %966 = vmatpush1.msra.mxu0 0.0
    %967 = vmatprep.subr.mxu0 0.0
    %968 = vmatpush1.msra.mxu0 0.0
    %969 = vmatprep.subr.mxu0 0.0
    %970 = vmatpush1.msra.mxu0 0.0
    %971 = vmatprep.subr.mxu0 0.0
    %972 = vmatpush1.msra.mxu0 0.0
    %973 = vmatprep.subr.mxu0 0.0
    %974 = vmatpush1.msra.mxu0 0.0
    %975 = vmatprep.subr.mxu0 0.0
    %976 = vmatpush1.msra.mxu0 0.0
    %977 = vmatprep.subr.mxu0 0.0
    %978 = vmatpush1.msra.mxu0 0.0
    %979 = vmatprep.subr.mxu0 0.0
    %v980 = vand.u32 %v10, 4294901760
    %981 = vmatpush1.msra.mxu0 %v980
    %982 = vmatprep.subr.mxu0 0.0
    %v983 = vand.u32 %v9, 4294901760
    %984 = vmatpush1.msra.mxu0 %v983
    %985 = vmatprep.subr.mxu0 0.0
    %986 = vmatpush2.msra.mxu0 0.0
    %987 = vmatprep.subr.mxu0 0.0
    %988 = vmatpush2.msra.mxu0 0.0
    %989 = vmatprep.subr.mxu0 0.0
    %990 = vmatpush2.msra.mxu0 0.0
    %991 = vmatprep.subr.mxu0 0.0
    %992 = vmatpush2.msra.mxu0 0.0
    %993 = vmatprep.subr.mxu0 0.0
    %994 = vmatpush2.msra.mxu0 0.0
    %995 = vmatprep.subr.mxu0 0.0
    %996 = vmatpush2.msra.mxu0 0.0
    %997 = vmatprep.subr.mxu0 0.0
    %998 = vmatpush2.msra.mxu0 0.0
    %999 = vmatprep.subr.mxu0 0.0
    %1000 = vmatpush2.msra.mxu0 0.0
    %1001 = vmatprep.subr.mxu0 0.0
    %1002 = vmatpush2.msra.mxu0 0.0
    %1003 = vmatprep.subr.mxu0 0.0
    %1004 = vmatpush2.msra.mxu0 0.0
    %1005 = vmatprep.subr.mxu0 0.0
    %1006 = vmatpush2.msra.mxu0 0.0
    %1007 = vmatprep.subr.mxu0 0.0
    %1008 = vmatpush2.msra.mxu0 0.0
    %1009 = vmatprep.subr.mxu0 0.0
    %1010 = vmatpush2.msra.mxu0 0.0
    %1011 = vmatprep.subr.mxu0 0.0
    %1012 = vmatpush2.msra.mxu0 0.0
    %1013 = vmatprep.subr.mxu0 0.0
    %1014 = vmatpush2.msra.mxu0 0.0
    %1015 = vmatprep.subr.mxu0 0.0
    %1016 = vmatpush2.msra.mxu0 0.0
    %1017 = vmatprep.mubr.f32.mxu0 0.0
    %v1018 = vand.u32 %v563, 4294901760
    %1019 = vmatmul.mubr.f32.gmra.mxu0 %v1018
    %v1020 = vpop.f32.mrf.mxu0
    %v1021 = vadd.f32 %v948, %v1020
    %v1022 = vpop.f32.mrf.mxu0
    %1023 = vdwg.mxu0
    %v1024 = vmul.f32 %v1021, %v1021
    %v1025 = vsel %vm88, %v1024, 0.0
    %1026 = vadd.xlane.f32.xlu0 %v1025
    %v1027 = vpop.xlane.xlu0 %1026
    %v1028 = vrot.slane %v1027, 4
    %v1029 = vadd.f32 %v1027, %v1028
    %v1030 = vrot.slane %v1029, 2
    %v1031 = vadd.f32 %v1029, %v1030
    %v1032 = vrot.slane %v1031, 1
    %v1033 = vadd.f32 %v1031, %v1032
    %s1034 = vtos %v1033
    %v1035 = vstv %s1034
    %v1036 = vrsqrt.pop %v1035
    %v1037 = vmul.f32 %v1035, %v1036
    %vm1038 = vcmp.eq.f32.partialorder %v1035, inf
    %v1039 = vsel %vm1038, %v1035, %v1037
    %vm1040 = vcmp.eq.f32.partialorder %v1035, 0.0
    %v1041 = vand.u32 %v1035, 2147483648
    %v1042 = vsel %vm1040, %v1041, %v1039
    %s1043 = vtos %v1042
    %s1044 = smax.f32 %s1043, 1e-30
    %v1045 = vstv %s1044
    %v1046 = vrcp.pop %v1045
    %v1047 = vmul.f32 %v1021, %v1046
    %v1049 = vsel %vm45, %v1047, 0
    %1051 = vmatprep.subr.mxu0 0.0
    %1052 = vmatpush1.msra.mxu0 0.0
    %1053 = vmatprep.subr.mxu0 0.0
    %1054 = vmatpush1.msra.mxu0 0.0
    %1055 = vmatprep.subr.mxu0 0.0
    %1056 = vmatpush1.msra.mxu0 0.0
    %1057 = vmatprep.subr.mxu0 0.0
    %1058 = vmatpush1.msra.mxu0 0.0
    %1059 = vmatprep.subr.mxu0 0.0
    %1060 = vmatpush1.msra.mxu0 0.0
    %1061 = vmatprep.subr.mxu0 0.0
    %1062 = vmatpush1.msra.mxu0 0.0
    %1063 = vmatprep.subr.mxu0 0.0
    %1064 = vmatpush1.msra.mxu0 0.0
    %1065 = vmatprep.subr.mxu0 0.0
    %1066 = vmatpush1.msra.mxu0 0.0
    %1067 = vmatprep.subr.mxu0 0.0
    %1068 = vmatpush1.msra.mxu0 0.0
    %1069 = vmatprep.subr.mxu0 0.0
    %1070 = vmatpush1.msra.mxu0 0.0
    %1071 = vmatprep.subr.mxu0 0.0
    %1072 = vmatpush1.msra.mxu0 0.0
    %1073 = vmatprep.subr.mxu0 0.0
    %1074 = vmatpush1.msra.mxu0 0.0
    %1075 = vmatprep.subr.mxu0 0.0
    %1076 = vmatpush1.msra.mxu0 0.0
    %1077 = vmatprep.subr.mxu0 0.0
    %1078 = vmatpush1.msra.mxu0 0.0
    %1079 = vmatprep.subr.mxu0 0.0
    %1080 = vmatpush1.msra.mxu0 0.0
    %1081 = vmatprep.subr.mxu0 0.0
    %v1082 = vand.u32 %v27, 4294901760
    %1083 = vmatpush1.msra.mxu0 %v1082
    %1084 = vmatprep.subr.mxu0 0.0
    %1085 = vmatpush2.msra.mxu0 0.0
    %1086 = vmatprep.subr.mxu0 0.0
    %1087 = vmatpush2.msra.mxu0 0.0
    %1088 = vmatprep.subr.mxu0 0.0
    %1089 = vmatpush2.msra.mxu0 0.0
    %1090 = vmatprep.subr.mxu0 0.0
    %1091 = vmatpush2.msra.mxu0 0.0
    %1092 = vmatprep.subr.mxu0 0.0
    %1093 = vmatpush2.msra.mxu0 0.0
    %1094 = vmatprep.subr.mxu0 0.0
    %1095 = vmatpush2.msra.mxu0 0.0
    %1096 = vmatprep.subr.mxu0 0.0
    %1097 = vmatpush2.msra.mxu0 0.0
    %1098 = vmatprep.subr.mxu0 0.0
    %1099 = vmatpush2.msra.mxu0 0.0
    %1100 = vmatprep.subr.mxu0 0.0
    %1101 = vmatpush2.msra.mxu0 0.0
    %1102 = vmatprep.subr.mxu0 0.0
    %1103 = vmatpush2.msra.mxu0 0.0
    %1104 = vmatprep.subr.mxu0 0.0
    %1105 = vmatpush2.msra.mxu0 0.0
    %1106 = vmatprep.subr.mxu0 0.0
    %1107 = vmatpush2.msra.mxu0 0.0
    %1108 = vmatprep.subr.mxu0 0.0
    %1109 = vmatpush2.msra.mxu0 0.0
    %1110 = vmatprep.subr.mxu0 0.0
    %1111 = vmatpush2.msra.mxu0 0.0
    %1112 = vmatprep.subr.mxu0 0.0
    %1113 = vmatpush2.msra.mxu0 0.0
    %1114 = vmatprep.subr.mxu0 0.0
    %1115 = vmatpush2.msra.mxu0 0.0
    %1116 = vmatprep.mubr.f32.mxu0 0.0
    %v1117 = vand.u32 %v1049, 4294901760
    %v1118 = vsub.f32 %v1049, %v1117
    %v1119 = vand.u32 %v1118, 4294901760
    %v1120 = vsub.f32 %v1118, %v1119
    %v1121 = vand.u32 %v1120, 4294901760
    %1122 = vmatmul.mubr.f32.gmra.mxu0 %v1121
    %v1123 = vpop.f32.mrf.mxu0
    %v1124 = vadd.f32 0.0, %v1123
    %v1125 = vpop.f32.mrf.mxu0
    %1126 = vdwg.mxu0
    %1127 = vmatprep.subr.mxu0 0.0
    %1128 = vmatpush1.msra.mxu0 0.0
    %1129 = vmatprep.subr.mxu0 0.0
    %1130 = vmatpush1.msra.mxu0 0.0
    %1131 = vmatprep.subr.mxu0 0.0
    %1132 = vmatpush1.msra.mxu0 0.0
    %1133 = vmatprep.subr.mxu0 0.0
    %1134 = vmatpush1.msra.mxu0 0.0
    %1135 = vmatprep.subr.mxu0 0.0
    %1136 = vmatpush1.msra.mxu0 0.0
    %1137 = vmatprep.subr.mxu0 0.0
    %1138 = vmatpush1.msra.mxu0 0.0
    %1139 = vmatprep.subr.mxu0 0.0
    %1140 = vmatpush1.msra.mxu0 0.0
    %1141 = vmatprep.subr.mxu0 0.0
    %1142 = vmatpush1.msra.mxu0 0.0
    %1143 = vmatprep.subr.mxu0 0.0
    %1144 = vmatpush1.msra.mxu0 0.0
    %1145 = vmatprep.subr.mxu0 0.0
    %1146 = vmatpush1.msra.mxu0 0.0
    %1147 = vmatprep.subr.mxu0 0.0
    %1148 = vmatpush1.msra.mxu0 0.0
    %1149 = vmatprep.subr.mxu0 0.0
    %1150 = vmatpush1.msra.mxu0 0.0
    %1151 = vmatprep.subr.mxu0 0.0
    %1152 = vmatpush1.msra.mxu0 0.0
    %1153 = vmatprep.subr.mxu0 0.0
    %1154 = vmatpush1.msra.mxu0 0.0
    %1155 = vmatprep.subr.mxu0 0.0
    %1156 = vmatpush1.msra.mxu0 0.0
    %1157 = vmatprep.subr.mxu0 0.0
    %v1158 = vand.u32 %v27, 4294901760
    %v1159 = vsub.f32 %v27, %v1158
    %v1160 = vand.u32 %v1159, 4294901760
    %v1161 = vsub.f32 %v1159, %v1160
    %v1162 = vand.u32 %v1161, 4294901760
    %1163 = vmatpush1.msra.mxu0 %v1162
    %1164 = vmatprep.subr.mxu0 0.0
    %1165 = vmatpush2.msra.mxu0 0.0
    %1166 = vmatprep.subr.mxu0 0.0
    %1167 = vmatpush2.msra.mxu0 0.0
    %1168 = vmatprep.subr.mxu0 0.0
    %1169 = vmatpush2.msra.mxu0 0.0
    %1170 = vmatprep.subr.mxu0 0.0
    %1171 = vmatpush2.msra.mxu0 0.0
    %1172 = vmatprep.subr.mxu0 0.0
    %1173 = vmatpush2.msra.mxu0 0.0
    %1174 = vmatprep.subr.mxu0 0.0
    %1175 = vmatpush2.msra.mxu0 0.0
    %1176 = vmatprep.subr.mxu0 0.0
    %1177 = vmatpush2.msra.mxu0 0.0
    %1178 = vmatprep.subr.mxu0 0.0
    %1179 = vmatpush2.msra.mxu0 0.0
    %1180 = vmatprep.subr.mxu0 0.0
    %1181 = vmatpush2.msra.mxu0 0.0
    %1182 = vmatprep.subr.mxu0 0.0
    %1183 = vmatpush2.msra.mxu0 0.0
    %1184 = vmatprep.subr.mxu0 0.0
    %1185 = vmatpush2.msra.mxu0 0.0
    %1186 = vmatprep.subr.mxu0 0.0
    %1187 = vmatpush2.msra.mxu0 0.0
    %1188 = vmatprep.subr.mxu0 0.0
    %1189 = vmatpush2.msra.mxu0 0.0
    %1190 = vmatprep.subr.mxu0 0.0
    %1191 = vmatpush2.msra.mxu0 0.0
    %1192 = vmatprep.subr.mxu0 0.0
    %1193 = vmatpush2.msra.mxu0 0.0
    %1194 = vmatprep.subr.mxu0 0.0
    %1195 = vmatpush2.msra.mxu0 0.0
    %1196 = vmatprep.mubr.f32.mxu0 0.0
    %v1197 = vand.u32 %v1049, 4294901760
    %1198 = vmatmul.mubr.f32.gmra.mxu0 %v1197
    %v1199 = vpop.f32.mrf.mxu0
    %v1200 = vadd.f32 %v1124, %v1199
    %v1201 = vpop.f32.mrf.mxu0
    %1202 = vdwg.mxu0
    %1203 = vmatprep.subr.mxu0 0.0
    %1204 = vmatpush1.msra.mxu0 0.0
    %1205 = vmatprep.subr.mxu0 0.0
    %1206 = vmatpush1.msra.mxu0 0.0
    %1207 = vmatprep.subr.mxu0 0.0
    %1208 = vmatpush1.msra.mxu0 0.0
    %1209 = vmatprep.subr.mxu0 0.0
    %1210 = vmatpush1.msra.mxu0 0.0
    %1211 = vmatprep.subr.mxu0 0.0
    %1212 = vmatpush1.msra.mxu0 0.0
    %1213 = vmatprep.subr.mxu0 0.0
    %1214 = vmatpush1.msra.mxu0 0.0
    %1215 = vmatprep.subr.mxu0 0.0
    %1216 = vmatpush1.msra.mxu0 0.0
    %1217 = vmatprep.subr.mxu0 0.0
    %1218 = vmatpush1.msra.mxu0 0.0
    %1219 = vmatprep.subr.mxu0 0.0
    %1220 = vmatpush1.msra.mxu0 0.0
    %1221 = vmatprep.subr.mxu0 0.0
    %1222 = vmatpush1.msra.mxu0 0.0
    %1223 = vmatprep.subr.mxu0 0.0
    %1224 = vmatpush1.msra.mxu0 0.0
    %1225 = vmatprep.subr.mxu0 0.0
    %1226 = vmatpush1.msra.mxu0 0.0
    %1227 = vmatprep.subr.mxu0 0.0
    %1228 = vmatpush1.msra.mxu0 0.0
    %1229 = vmatprep.subr.mxu0 0.0
    %1230 = vmatpush1.msra.mxu0 0.0
    %1231 = vmatprep.subr.mxu0 0.0
    %1232 = vmatpush1.msra.mxu0 0.0
    %1233 = vmatprep.subr.mxu0 0.0
    %v1234 = vand.u32 %v27, 4294901760
    %v1235 = vsub.f32 %v27, %v1234
    %1236 = vmatpush1.msra.mxu0 %v1235
    %1237 = vmatprep.subr.mxu0 0.0
    %1238 = vmatpush2.msra.mxu0 0.0
    %1239 = vmatprep.subr.mxu0 0.0
    %1240 = vmatpush2.msra.mxu0 0.0
    %1241 = vmatprep.subr.mxu0 0.0
    %1242 = vmatpush2.msra.mxu0 0.0
    %1243 = vmatprep.subr.mxu0 0.0
    %1244 = vmatpush2.msra.mxu0 0.0
    %1245 = vmatprep.subr.mxu0 0.0
    %1246 = vmatpush2.msra.mxu0 0.0
    %1247 = vmatprep.subr.mxu0 0.0
    %1248 = vmatpush2.msra.mxu0 0.0
    %1249 = vmatprep.subr.mxu0 0.0
    %1250 = vmatpush2.msra.mxu0 0.0
    %1251 = vmatprep.subr.mxu0 0.0
    %1252 = vmatpush2.msra.mxu0 0.0
    %1253 = vmatprep.subr.mxu0 0.0
    %1254 = vmatpush2.msra.mxu0 0.0
    %1255 = vmatprep.subr.mxu0 0.0
    %1256 = vmatpush2.msra.mxu0 0.0
    %1257 = vmatprep.subr.mxu0 0.0
    %1258 = vmatpush2.msra.mxu0 0.0
    %1259 = vmatprep.subr.mxu0 0.0
    %1260 = vmatpush2.msra.mxu0 0.0
    %1261 = vmatprep.subr.mxu0 0.0
    %1262 = vmatpush2.msra.mxu0 0.0
    %1263 = vmatprep.subr.mxu0 0.0
    %1264 = vmatpush2.msra.mxu0 0.0
    %1265 = vmatprep.subr.mxu0 0.0
    %1266 = vmatpush2.msra.mxu0 0.0
    %1267 = vmatprep.subr.mxu0 0.0
    %1268 = vmatpush2.msra.mxu0 0.0
    %1269 = vmatprep.mubr.f32.mxu0 0.0
    %v1270 = vand.u32 %v1049, 4294901760
    %v1271 = vsub.f32 %v1049, %v1270
    %1272 = vmatmul.mubr.f32.gmra.mxu0 %v1271
    %v1273 = vpop.f32.mrf.mxu0
    %v1274 = vadd.f32 %v1200, %v1273
    %v1275 = vpop.f32.mrf.mxu0
    %1276 = vdwg.mxu0
    %1277 = vmatprep.subr.mxu0 0.0
    %1278 = vmatpush1.msra.mxu0 0.0
    %1279 = vmatprep.subr.mxu0 0.0
    %1280 = vmatpush1.msra.mxu0 0.0
    %1281 = vmatprep.subr.mxu0 0.0
    %1282 = vmatpush1.msra.mxu0 0.0
    %1283 = vmatprep.subr.mxu0 0.0
    %1284 = vmatpush1.msra.mxu0 0.0
    %1285 = vmatprep.subr.mxu0 0.0
    %1286 = vmatpush1.msra.mxu0 0.0
    %1287 = vmatprep.subr.mxu0 0.0
    %1288 = vmatpush1.msra.mxu0 0.0
    %1289 = vmatprep.subr.mxu0 0.0
    %1290 = vmatpush1.msra.mxu0 0.0
    %1291 = vmatprep.subr.mxu0 0.0
    %1292 = vmatpush1.msra.mxu0 0.0
    %1293 = vmatprep.subr.mxu0 0.0
    %1294 = vmatpush1.msra.mxu0 0.0
    %1295 = vmatprep.subr.mxu0 0.0
    %1296 = vmatpush1.msra.mxu0 0.0
    %1297 = vmatprep.subr.mxu0 0.0
    %1298 = vmatpush1.msra.mxu0 0.0
    %1299 = vmatprep.subr.mxu0 0.0
    %1300 = vmatpush1.msra.mxu0 0.0
    %1301 = vmatprep.subr.mxu0 0.0
    %1302 = vmatpush1.msra.mxu0 0.0
    %1303 = vmatprep.subr.mxu0 0.0
    %1304 = vmatpush1.msra.mxu0 0.0
    %1305 = vmatprep.subr.mxu0 0.0
    %1306 = vmatpush1.msra.mxu0 0.0
    %1307 = vmatprep.subr.mxu0 0.0
    %v1308 = vand.u32 %v27, 4294901760
    %1309 = vmatpush1.msra.mxu0 %v1308
    %1310 = vmatprep.subr.mxu0 0.0
    %1311 = vmatpush2.msra.mxu0 0.0
    %1312 = vmatprep.subr.mxu0 0.0
    %1313 = vmatpush2.msra.mxu0 0.0
    %1314 = vmatprep.subr.mxu0 0.0
    %1315 = vmatpush2.msra.mxu0 0.0
    %1316 = vmatprep.subr.mxu0 0.0
    %1317 = vmatpush2.msra.mxu0 0.0
    %1318 = vmatprep.subr.mxu0 0.0
    %1319 = vmatpush2.msra.mxu0 0.0
    %1320 = vmatprep.subr.mxu0 0.0
    %1321 = vmatpush2.msra.mxu0 0.0
    %1322 = vmatprep.subr.mxu0 0.0
    %1323 = vmatpush2.msra.mxu0 0.0
    %1324 = vmatprep.subr.mxu0 0.0
    %1325 = vmatpush2.msra.mxu0 0.0
    %1326 = vmatprep.subr.mxu0 0.0
    %1327 = vmatpush2.msra.mxu0 0.0
    %1328 = vmatprep.subr.mxu0 0.0
    %1329 = vmatpush2.msra.mxu0 0.0
    %1330 = vmatprep.subr.mxu0 0.0
    %1331 = vmatpush2.msra.mxu0 0.0
    %1332 = vmatprep.subr.mxu0 0.0
    %1333 = vmatpush2.msra.mxu0 0.0
    %1334 = vmatprep.subr.mxu0 0.0
    %1335 = vmatpush2.msra.mxu0 0.0
    %1336 = vmatprep.subr.mxu0 0.0
    %1337 = vmatpush2.msra.mxu0 0.0
    %1338 = vmatprep.subr.mxu0 0.0
    %1339 = vmatpush2.msra.mxu0 0.0
    %1340 = vmatprep.subr.mxu0 0.0
    %1341 = vmatpush2.msra.mxu0 0.0
    %1342 = vmatprep.mubr.f32.mxu0 0.0
    %v1343 = vand.u32 %v1049, 4294901760
    %v1344 = vsub.f32 %v1049, %v1343
    %v1345 = vand.u32 %v1344, 4294901760
    %1346 = vmatmul.mubr.f32.gmra.mxu0 %v1345
    %v1347 = vpop.f32.mrf.mxu0
    %v1348 = vadd.f32 %v1274, %v1347
    %v1349 = vpop.f32.mrf.mxu0
    %1350 = vdwg.mxu0
    %1351 = vmatprep.subr.mxu0 0.0
    %1352 = vmatpush1.msra.mxu0 0.0
    %1353 = vmatprep.subr.mxu0 0.0
    %1354 = vmatpush1.msra.mxu0 0.0
    %1355 = vmatprep.subr.mxu0 0.0
    %1356 = vmatpush1.msra.mxu0 0.0
    %1357 = vmatprep.subr.mxu0 0.0
    %1358 = vmatpush1.msra.mxu0 0.0
    %1359 = vmatprep.subr.mxu0 0.0
    %1360 = vmatpush1.msra.mxu0 0.0
    %1361 = vmatprep.subr.mxu0 0.0
    %1362 = vmatpush1.msra.mxu0 0.0
    %1363 = vmatprep.subr.mxu0 0.0
    %1364 = vmatpush1.msra.mxu0 0.0
    %1365 = vmatprep.subr.mxu0 0.0
    %1366 = vmatpush1.msra.mxu0 0.0
    %1367 = vmatprep.subr.mxu0 0.0
    %1368 = vmatpush1.msra.mxu0 0.0
    %1369 = vmatprep.subr.mxu0 0.0
    %1370 = vmatpush1.msra.mxu0 0.0
    %1371 = vmatprep.subr.mxu0 0.0
    %1372 = vmatpush1.msra.mxu0 0.0
    %1373 = vmatprep.subr.mxu0 0.0
    %1374 = vmatpush1.msra.mxu0 0.0
    %1375 = vmatprep.subr.mxu0 0.0
    %1376 = vmatpush1.msra.mxu0 0.0
    %1377 = vmatprep.subr.mxu0 0.0
    %1378 = vmatpush1.msra.mxu0 0.0
    %1379 = vmatprep.subr.mxu0 0.0
    %1380 = vmatpush1.msra.mxu0 0.0
    %1381 = vmatprep.subr.mxu0 0.0
    %v1382 = vand.u32 %v27, 4294901760
    %v1383 = vsub.f32 %v27, %v1382
    %v1384 = vand.u32 %v1383, 4294901760
    %1385 = vmatpush1.msra.mxu0 %v1384
    %1386 = vmatprep.subr.mxu0 0.0
    %1387 = vmatpush2.msra.mxu0 0.0
    %1388 = vmatprep.subr.mxu0 0.0
    %1389 = vmatpush2.msra.mxu0 0.0
    %1390 = vmatprep.subr.mxu0 0.0
    %1391 = vmatpush2.msra.mxu0 0.0
    %1392 = vmatprep.subr.mxu0 0.0
    %1393 = vmatpush2.msra.mxu0 0.0
    %1394 = vmatprep.subr.mxu0 0.0
    %1395 = vmatpush2.msra.mxu0 0.0
    %1396 = vmatprep.subr.mxu0 0.0
    %1397 = vmatpush2.msra.mxu0 0.0
    %1398 = vmatprep.subr.mxu0 0.0
    %1399 = vmatpush2.msra.mxu0 0.0
    %1400 = vmatprep.subr.mxu0 0.0
    %1401 = vmatpush2.msra.mxu0 0.0
    %1402 = vmatprep.subr.mxu0 0.0
    %1403 = vmatpush2.msra.mxu0 0.0
    %1404 = vmatprep.subr.mxu0 0.0
    %1405 = vmatpush2.msra.mxu0 0.0
    %1406 = vmatprep.subr.mxu0 0.0
    %1407 = vmatpush2.msra.mxu0 0.0
    %1408 = vmatprep.subr.mxu0 0.0
    %1409 = vmatpush2.msra.mxu0 0.0
    %1410 = vmatprep.subr.mxu0 0.0
    %1411 = vmatpush2.msra.mxu0 0.0
    %1412 = vmatprep.subr.mxu0 0.0
    %1413 = vmatpush2.msra.mxu0 0.0
    %1414 = vmatprep.subr.mxu0 0.0
    %1415 = vmatpush2.msra.mxu0 0.0
    %1416 = vmatprep.subr.mxu0 0.0
    %1417 = vmatpush2.msra.mxu0 0.0
    %1418 = vmatprep.mubr.f32.mxu0 0.0
    %v1419 = vand.u32 %v1049, 4294901760
    %1420 = vmatmul.mubr.f32.gmra.mxu0 %v1419
    %v1421 = vpop.f32.mrf.mxu0
    %v1422 = vadd.f32 %v1348, %v1421
    %v1423 = vpop.f32.mrf.mxu0
    %1424 = vdwg.mxu0
    %1425 = vmatprep.subr.mxu0 0.0
    %1426 = vmatpush1.msra.mxu0 0.0
    %1427 = vmatprep.subr.mxu0 0.0
    %1428 = vmatpush1.msra.mxu0 0.0
    %1429 = vmatprep.subr.mxu0 0.0
    %1430 = vmatpush1.msra.mxu0 0.0
    %1431 = vmatprep.subr.mxu0 0.0
    %1432 = vmatpush1.msra.mxu0 0.0
    %1433 = vmatprep.subr.mxu0 0.0
    %1434 = vmatpush1.msra.mxu0 0.0
    %1435 = vmatprep.subr.mxu0 0.0
    %1436 = vmatpush1.msra.mxu0 0.0
    %1437 = vmatprep.subr.mxu0 0.0
    %1438 = vmatpush1.msra.mxu0 0.0
    %1439 = vmatprep.subr.mxu0 0.0
    %1440 = vmatpush1.msra.mxu0 0.0
    %1441 = vmatprep.subr.mxu0 0.0
    %1442 = vmatpush1.msra.mxu0 0.0
    %1443 = vmatprep.subr.mxu0 0.0
    %1444 = vmatpush1.msra.mxu0 0.0
    %1445 = vmatprep.subr.mxu0 0.0
    %1446 = vmatpush1.msra.mxu0 0.0
    %1447 = vmatprep.subr.mxu0 0.0
    %1448 = vmatpush1.msra.mxu0 0.0
    %1449 = vmatprep.subr.mxu0 0.0
    %1450 = vmatpush1.msra.mxu0 0.0
    %1451 = vmatprep.subr.mxu0 0.0
    %1452 = vmatpush1.msra.mxu0 0.0
    %1453 = vmatprep.subr.mxu0 0.0
    %1454 = vmatpush1.msra.mxu0 0.0
    %1455 = vmatprep.subr.mxu0 0.0
    %v1456 = vand.u32 %v27, 4294901760
    %1457 = vmatpush1.msra.mxu0 %v1456
    %1458 = vmatprep.subr.mxu0 0.0
    %1459 = vmatpush2.msra.mxu0 0.0
    %1460 = vmatprep.subr.mxu0 0.0
    %1461 = vmatpush2.msra.mxu0 0.0
    %1462 = vmatprep.subr.mxu0 0.0
    %1463 = vmatpush2.msra.mxu0 0.0
    %1464 = vmatprep.subr.mxu0 0.0
    %1465 = vmatpush2.msra.mxu0 0.0
    %1466 = vmatprep.subr.mxu0 0.0
    %1467 = vmatpush2.msra.mxu0 0.0
    %1468 = vmatprep.subr.mxu0 0.0
    %1469 = vmatpush2.msra.mxu0 0.0
    %1470 = vmatprep.subr.mxu0 0.0
    %1471 = vmatpush2.msra.mxu0 0.0
    %1472 = vmatprep.subr.mxu0 0.0
    %1473 = vmatpush2.msra.mxu0 0.0
    %1474 = vmatprep.subr.mxu0 0.0
    %1475 = vmatpush2.msra.mxu0 0.0
    %1476 = vmatprep.subr.mxu0 0.0
    %1477 = vmatpush2.msra.mxu0 0.0
    %1478 = vmatprep.subr.mxu0 0.0
    %1479 = vmatpush2.msra.mxu0 0.0
    %1480 = vmatprep.subr.mxu0 0.0
    %1481 = vmatpush2.msra.mxu0 0.0
    %1482 = vmatprep.subr.mxu0 0.0
    %1483 = vmatpush2.msra.mxu0 0.0
    %1484 = vmatprep.subr.mxu0 0.0
    %1485 = vmatpush2.msra.mxu0 0.0
    %1486 = vmatprep.subr.mxu0 0.0
    %1487 = vmatpush2.msra.mxu0 0.0
    %1488 = vmatprep.subr.mxu0 0.0
    %1489 = vmatpush2.msra.mxu0 0.0
    %1490 = vmatprep.mubr.f32.mxu0 0.0
    %v1491 = vand.u32 %v1049, 4294901760
    %1492 = vmatmul.mubr.f32.gmra.mxu0 %v1491
    %v1493 = vpop.f32.mrf.mxu0
    %v1494 = vadd.f32 %v1422, %v1493
    %v1495 = vpop.f32.mrf.mxu0
    %1496 = vdwg.mxu0
    %v1498 = vsel %vm561, %v1494, 0
    %1500 = vmatprep.subr.mxu0 0.0
    %1501 = vmatpush1.msra.mxu0 0.0
    %1502 = vmatprep.subr.mxu0 0.0
    %1503 = vmatpush1.msra.mxu0 0.0
    %1504 = vmatprep.subr.mxu0 0.0
    %1505 = vmatpush1.msra.mxu0 0.0
    %1506 = vmatprep.subr.mxu0 0.0
    %1507 = vmatpush1.msra.mxu0 0.0
    %1508 = vmatprep.subr.mxu0 0.0
    %1509 = vmatpush1.msra.mxu0 0.0
    %1510 = vmatprep.subr.mxu0 0.0
    %1511 = vmatpush1.msra.mxu0 0.0
    %1512 = vmatprep.subr.mxu0 0.0
    %1513 = vmatpush1.msra.mxu0 0.0
    %1514 = vmatprep.subr.mxu0 0.0
    %1515 = vmatpush1.msra.mxu0 0.0
    %1516 = vmatprep.subr.mxu0 0.0
    %1517 = vmatpush1.msra.mxu0 0.0
    %1518 = vmatprep.subr.mxu0 0.0
    %1519 = vmatpush1.msra.mxu0 0.0
    %1520 = vmatprep.subr.mxu0 0.0
    %1521 = vmatpush1.msra.mxu0 0.0
    %1522 = vmatprep.subr.mxu0 0.0
    %1523 = vmatpush1.msra.mxu0 0.0
    %1524 = vmatprep.subr.mxu0 0.0
    %1525 = vmatpush1.msra.mxu0 0.0
    %1526 = vmatprep.subr.mxu0 0.0
    %1527 = vmatpush1.msra.mxu0 0.0
    %1528 = vmatprep.subr.mxu0 0.0
    %v1529 = vand.u32 %v10, 4294901760
    %1530 = vmatpush1.msra.mxu0 %v1529
    %1531 = vmatprep.subr.mxu0 0.0
    %v1532 = vand.u32 %v9, 4294901760
    %1533 = vmatpush1.msra.mxu0 %v1532
    %1534 = vmatprep.subr.mxu0 0.0
    %1535 = vmatpush2.msra.mxu0 0.0
    %1536 = vmatprep.subr.mxu0 0.0
    %1537 = vmatpush2.msra.mxu0 0.0
    %1538 = vmatprep.subr.mxu0 0.0
    %1539 = vmatpush2.msra.mxu0 0.0
    %1540 = vmatprep.subr.mxu0 0.0
    %1541 = vmatpush2.msra.mxu0 0.0
    %1542 = vmatprep.subr.mxu0 0.0
    %1543 = vmatpush2.msra.mxu0 0.0
    %1544 = vmatprep.subr.mxu0 0.0
    %1545 = vmatpush2.msra.mxu0 0.0
    %1546 = vmatprep.subr.mxu0 0.0
    %1547 = vmatpush2.msra.mxu0 0.0
    %1548 = vmatprep.subr.mxu0 0.0
    %1549 = vmatpush2.msra.mxu0 0.0
    %1550 = vmatprep.subr.mxu0 0.0
    %1551 = vmatpush2.msra.mxu0 0.0
    %1552 = vmatprep.subr.mxu0 0.0
    %1553 = vmatpush2.msra.mxu0 0.0
    %1554 = vmatprep.subr.mxu0 0.0
    %1555 = vmatpush2.msra.mxu0 0.0
    %1556 = vmatprep.subr.mxu0 0.0
    %1557 = vmatpush2.msra.mxu0 0.0
    %1558 = vmatprep.subr.mxu0 0.0
    %1559 = vmatpush2.msra.mxu0 0.0
    %1560 = vmatprep.subr.mxu0 0.0
    %1561 = vmatpush2.msra.mxu0 0.0
    %1562 = vmatprep.subr.mxu0 0.0
    %1563 = vmatpush2.msra.mxu0 0.0
    %1564 = vmatprep.subr.mxu0 0.0
    %1565 = vmatpush2.msra.mxu0 0.0
    %1566 = vmatprep.mubr.f32.mxu0 0.0
    %v1567 = vand.u32 %v1498, 4294901760
    %v1568 = vsub.f32 %v1498, %v1567
    %v1569 = vand.u32 %v1568, 4294901760
    %v1570 = vsub.f32 %v1568, %v1569
    %v1571 = vand.u32 %v1570, 4294901760
    %1572 = vmatmul.mubr.f32.gmra.mxu0 %v1571
    %v1573 = vpop.f32.mrf.mxu0
    %v1574 = vadd.f32 0.0, %v1573
    %v1575 = vpop.f32.mrf.mxu0
    %1576 = vdwg.mxu0
    %1577 = vmatprep.subr.mxu0 0.0
    %1578 = vmatpush1.msra.mxu0 0.0
    %1579 = vmatprep.subr.mxu0 0.0
    %1580 = vmatpush1.msra.mxu0 0.0
    %1581 = vmatprep.subr.mxu0 0.0
    %1582 = vmatpush1.msra.mxu0 0.0
    %1583 = vmatprep.subr.mxu0 0.0
    %1584 = vmatpush1.msra.mxu0 0.0
    %1585 = vmatprep.subr.mxu0 0.0
    %1586 = vmatpush1.msra.mxu0 0.0
    %1587 = vmatprep.subr.mxu0 0.0
    %1588 = vmatpush1.msra.mxu0 0.0
    %1589 = vmatprep.subr.mxu0 0.0
    %1590 = vmatpush1.msra.mxu0 0.0
    %1591 = vmatprep.subr.mxu0 0.0
    %1592 = vmatpush1.msra.mxu0 0.0
    %1593 = vmatprep.subr.mxu0 0.0
    %1594 = vmatpush1.msra.mxu0 0.0
    %1595 = vmatprep.subr.mxu0 0.0
    %1596 = vmatpush1.msra.mxu0 0.0
    %1597 = vmatprep.subr.mxu0 0.0
    %1598 = vmatpush1.msra.mxu0 0.0
    %1599 = vmatprep.subr.mxu0 0.0
    %1600 = vmatpush1.msra.mxu0 0.0
    %1601 = vmatprep.subr.mxu0 0.0
    %1602 = vmatpush1.msra.mxu0 0.0
    %1603 = vmatprep.subr.mxu0 0.0
    %1604 = vmatpush1.msra.mxu0 0.0
    %1605 = vmatprep.subr.mxu0 0.0
    %v1606 = vand.u32 %v10, 4294901760
    %v1607 = vsub.f32 %v10, %v1606
    %v1608 = vand.u32 %v1607, 4294901760
    %v1609 = vsub.f32 %v1607, %v1608
    %v1610 = vand.u32 %v1609, 4294901760
    %1611 = vmatpush1.msra.mxu0 %v1610
    %1612 = vmatprep.subr.mxu0 0.0
    %v1613 = vand.u32 %v9, 4294901760
    %v1614 = vsub.f32 %v9, %v1613
    %v1615 = vand.u32 %v1614, 4294901760
    %v1616 = vsub.f32 %v1614, %v1615
    %v1617 = vand.u32 %v1616, 4294901760
    %1618 = vmatpush1.msra.mxu0 %v1617
    %1619 = vmatprep.subr.mxu0 0.0
    %1620 = vmatpush2.msra.mxu0 0.0
    %1621 = vmatprep.subr.mxu0 0.0
    %1622 = vmatpush2.msra.mxu0 0.0
    %1623 = vmatprep.subr.mxu0 0.0
    %1624 = vmatpush2.msra.mxu0 0.0
    %1625 = vmatprep.subr.mxu0 0.0
    %1626 = vmatpush2.msra.mxu0 0.0
    %1627 = vmatprep.subr.mxu0 0.0
    %1628 = vmatpush2.msra.mxu0 0.0
    %1629 = vmatprep.subr.mxu0 0.0
    %1630 = vmatpush2.msra.mxu0 0.0
    %1631 = vmatprep.subr.mxu0 0.0
    %1632 = vmatpush2.msra.mxu0 0.0
    %1633 = vmatprep.subr.mxu0 0.0
    %1634 = vmatpush2.msra.mxu0 0.0
    %1635 = vmatprep.subr.mxu0 0.0
    %1636 = vmatpush2.msra.mxu0 0.0
    %1637 = vmatprep.subr.mxu0 0.0
    %1638 = vmatpush2.msra.mxu0 0.0
    %1639 = vmatprep.subr.mxu0 0.0
    %1640 = vmatpush2.msra.mxu0 0.0
    %1641 = vmatprep.subr.mxu0 0.0
    %1642 = vmatpush2.msra.mxu0 0.0
    %1643 = vmatprep.subr.mxu0 0.0
    %1644 = vmatpush2.msra.mxu0 0.0
    %1645 = vmatprep.subr.mxu0 0.0
    %1646 = vmatpush2.msra.mxu0 0.0
    %1647 = vmatprep.subr.mxu0 0.0
    %1648 = vmatpush2.msra.mxu0 0.0
    %1649 = vmatprep.subr.mxu0 0.0
    %1650 = vmatpush2.msra.mxu0 0.0
    %1651 = vmatprep.mubr.f32.mxu0 0.0
    %v1652 = vand.u32 %v1498, 4294901760
    %1653 = vmatmul.mubr.f32.gmra.mxu0 %v1652
    %v1654 = vpop.f32.mrf.mxu0
    %v1655 = vadd.f32 %v1574, %v1654
    %v1656 = vpop.f32.mrf.mxu0
    %1657 = vdwg.mxu0
    %1658 = vmatprep.subr.mxu0 0.0
    %1659 = vmatpush1.msra.mxu0 0.0
    %1660 = vmatprep.subr.mxu0 0.0
    %1661 = vmatpush1.msra.mxu0 0.0
    %1662 = vmatprep.subr.mxu0 0.0
    %1663 = vmatpush1.msra.mxu0 0.0
    %1664 = vmatprep.subr.mxu0 0.0
    %1665 = vmatpush1.msra.mxu0 0.0
    %1666 = vmatprep.subr.mxu0 0.0
    %1667 = vmatpush1.msra.mxu0 0.0
    %1668 = vmatprep.subr.mxu0 0.0
    %1669 = vmatpush1.msra.mxu0 0.0
    %1670 = vmatprep.subr.mxu0 0.0
    %1671 = vmatpush1.msra.mxu0 0.0
    %1672 = vmatprep.subr.mxu0 0.0
    %1673 = vmatpush1.msra.mxu0 0.0
    %1674 = vmatprep.subr.mxu0 0.0
    %1675 = vmatpush1.msra.mxu0 0.0
    %1676 = vmatprep.subr.mxu0 0.0
    %1677 = vmatpush1.msra.mxu0 0.0
    %1678 = vmatprep.subr.mxu0 0.0
    %1679 = vmatpush1.msra.mxu0 0.0
    %1680 = vmatprep.subr.mxu0 0.0
    %1681 = vmatpush1.msra.mxu0 0.0
    %1682 = vmatprep.subr.mxu0 0.0
    %1683 = vmatpush1.msra.mxu0 0.0
    %1684 = vmatprep.subr.mxu0 0.0
    %1685 = vmatpush1.msra.mxu0 0.0
    %1686 = vmatprep.subr.mxu0 0.0
    %v1687 = vand.u32 %v10, 4294901760
    %v1688 = vsub.f32 %v10, %v1687
    %1689 = vmatpush1.msra.mxu0 %v1688
    %1690 = vmatprep.subr.mxu0 0.0
    %v1691 = vand.u32 %v9, 4294901760
    %v1692 = vsub.f32 %v9, %v1691
    %1693 = vmatpush1.msra.mxu0 %v1692
    %1694 = vmatprep.subr.mxu0 0.0
    %1695 = vmatpush2.msra.mxu0 0.0
    %1696 = vmatprep.subr.mxu0 0.0
    %1697 = vmatpush2.msra.mxu0 0.0
    %1698 = vmatprep.subr.mxu0 0.0
    %1699 = vmatpush2.msra.mxu0 0.0
    %1700 = vmatprep.subr.mxu0 0.0
    %1701 = vmatpush2.msra.mxu0 0.0
    %1702 = vmatprep.subr.mxu0 0.0
    %1703 = vmatpush2.msra.mxu0 0.0
    %1704 = vmatprep.subr.mxu0 0.0
    %1705 = vmatpush2.msra.mxu0 0.0
    %1706 = vmatprep.subr.mxu0 0.0
    %1707 = vmatpush2.msra.mxu0 0.0
    %1708 = vmatprep.subr.mxu0 0.0
    %1709 = vmatpush2.msra.mxu0 0.0
    %1710 = vmatprep.subr.mxu0 0.0
    %1711 = vmatpush2.msra.mxu0 0.0
    %1712 = vmatprep.subr.mxu0 0.0
    %1713 = vmatpush2.msra.mxu0 0.0
    %1714 = vmatprep.subr.mxu0 0.0
    %1715 = vmatpush2.msra.mxu0 0.0
    %1716 = vmatprep.subr.mxu0 0.0
    %1717 = vmatpush2.msra.mxu0 0.0
    %1718 = vmatprep.subr.mxu0 0.0
    %1719 = vmatpush2.msra.mxu0 0.0
    %1720 = vmatprep.subr.mxu0 0.0
    %1721 = vmatpush2.msra.mxu0 0.0
    %1722 = vmatprep.subr.mxu0 0.0
    %1723 = vmatpush2.msra.mxu0 0.0
    %1724 = vmatprep.subr.mxu0 0.0
    %1725 = vmatpush2.msra.mxu0 0.0
    %1726 = vmatprep.mubr.f32.mxu0 0.0
    %v1727 = vand.u32 %v1498, 4294901760
    %v1728 = vsub.f32 %v1498, %v1727
    %1729 = vmatmul.mubr.f32.gmra.mxu0 %v1728
    %v1730 = vpop.f32.mrf.mxu0
    %v1731 = vadd.f32 %v1655, %v1730
    %v1732 = vpop.f32.mrf.mxu0
    %1733 = vdwg.mxu0
    %1734 = vmatprep.subr.mxu0 0.0
    %1735 = vmatpush1.msra.mxu0 0.0
    %1736 = vmatprep.subr.mxu0 0.0
    %1737 = vmatpush1.msra.mxu0 0.0
    %1738 = vmatprep.subr.mxu0 0.0
    %1739 = vmatpush1.msra.mxu0 0.0
    %1740 = vmatprep.subr.mxu0 0.0
    %1741 = vmatpush1.msra.mxu0 0.0
    %1742 = vmatprep.subr.mxu0 0.0
    %1743 = vmatpush1.msra.mxu0 0.0
    %1744 = vmatprep.subr.mxu0 0.0
    %1745 = vmatpush1.msra.mxu0 0.0
    %1746 = vmatprep.subr.mxu0 0.0
    %1747 = vmatpush1.msra.mxu0 0.0
    %1748 = vmatprep.subr.mxu0 0.0
    %1749 = vmatpush1.msra.mxu0 0.0
    %1750 = vmatprep.subr.mxu0 0.0
    %1751 = vmatpush1.msra.mxu0 0.0
    %1752 = vmatprep.subr.mxu0 0.0
    %1753 = vmatpush1.msra.mxu0 0.0
    %1754 = vmatprep.subr.mxu0 0.0
    %1755 = vmatpush1.msra.mxu0 0.0
    %1756 = vmatprep.subr.mxu0 0.0
    %1757 = vmatpush1.msra.mxu0 0.0
    %1758 = vmatprep.subr.mxu0 0.0
    %1759 = vmatpush1.msra.mxu0 0.0
    %1760 = vmatprep.subr.mxu0 0.0
    %1761 = vmatpush1.msra.mxu0 0.0
    %1762 = vmatprep.subr.mxu0 0.0
    %v1763 = vand.u32 %v10, 4294901760
    %1764 = vmatpush1.msra.mxu0 %v1763
    %1765 = vmatprep.subr.mxu0 0.0
    %v1766 = vand.u32 %v9, 4294901760
    %1767 = vmatpush1.msra.mxu0 %v1766
    %1768 = vmatprep.subr.mxu0 0.0
    %1769 = vmatpush2.msra.mxu0 0.0
    %1770 = vmatprep.subr.mxu0 0.0
    %1771 = vmatpush2.msra.mxu0 0.0
    %1772 = vmatprep.subr.mxu0 0.0
    %1773 = vmatpush2.msra.mxu0 0.0
    %1774 = vmatprep.subr.mxu0 0.0
    %1775 = vmatpush2.msra.mxu0 0.0
    %1776 = vmatprep.subr.mxu0 0.0
    %1777 = vmatpush2.msra.mxu0 0.0
    %1778 = vmatprep.subr.mxu0 0.0
    %1779 = vmatpush2.msra.mxu0 0.0
    %1780 = vmatprep.subr.mxu0 0.0
    %1781 = vmatpush2.msra.mxu0 0.0
    %1782 = vmatprep.subr.mxu0 0.0
    %1783 = vmatpush2.msra.mxu0 0.0
    %1784 = vmatprep.subr.mxu0 0.0
    %1785 = vmatpush2.msra.mxu0 0.0
    %1786 = vmatprep.subr.mxu0 0.0
    %1787 = vmatpush2.msra.mxu0 0.0
    %1788 = vmatprep.subr.mxu0 0.0
    %1789 = vmatpush2.msra.mxu0 0.0
    %1790 = vmatprep.subr.mxu0 0.0
    %1791 = vmatpush2.msra.mxu0 0.0
    %1792 = vmatprep.subr.mxu0 0.0
    %1793 = vmatpush2.msra.mxu0 0.0
    %1794 = vmatprep.subr.mxu0 0.0
    %1795 = vmatpush2.msra.mxu0 0.0
    %1796 = vmatprep.subr.mxu0 0.0
    %1797 = vmatpush2.msra.mxu0 0.0
    %1798 = vmatprep.subr.mxu0 0.0
    %1799 = vmatpush2.msra.mxu0 0.0
    %1800 = vmatprep.mubr.f32.mxu0 0.0
    %v1801 = vand.u32 %v1498, 4294901760
    %v1802 = vsub.f32 %v1498, %v1801
    %v1803 = vand.u32 %v1802, 4294901760
    %1804 = vmatmul.mubr.f32.gmra.mxu0 %v1803
    %v1805 = vpop.f32.mrf.mxu0
    %v1806 = vadd.f32 %v1731, %v1805
    %v1807 = vpop.f32.mrf.mxu0
    %1808 = vdwg.mxu0
    %1809 = vmatprep.subr.mxu0 0.0
    %1810 = vmatpush1.msra.mxu0 0.0
    %1811 = vmatprep.subr.mxu0 0.0
    %1812 = vmatpush1.msra.mxu0 0.0
    %1813 = vmatprep.subr.mxu0 0.0
    %1814 = vmatpush1.msra.mxu0 0.0
    %1815 = vmatprep.subr.mxu0 0.0
    %1816 = vmatpush1.msra.mxu0 0.0
    %1817 = vmatprep.subr.mxu0 0.0
    %1818 = vmatpush1.msra.mxu0 0.0
    %1819 = vmatprep.subr.mxu0 0.0
    %1820 = vmatpush1.msra.mxu0 0.0
    %1821 = vmatprep.subr.mxu0 0.0
    %1822 = vmatpush1.msra.mxu0 0.0
    %1823 = vmatprep.subr.mxu0 0.0
    %1824 = vmatpush1.msra.mxu0 0.0
    %1825 = vmatprep.subr.mxu0 0.0
    %1826 = vmatpush1.msra.mxu0 0.0
    %1827 = vmatprep.subr.mxu0 0.0
    %1828 = vmatpush1.msra.mxu0 0.0
    %1829 = vmatprep.subr.mxu0 0.0
    %1830 = vmatpush1.msra.mxu0 0.0
    %1831 = vmatprep.subr.mxu0 0.0
    %1832 = vmatpush1.msra.mxu0 0.0
    %1833 = vmatprep.subr.mxu0 0.0
    %1834 = vmatpush1.msra.mxu0 0.0
    %1835 = vmatprep.subr.mxu0 0.0
    %1836 = vmatpush1.msra.mxu0 0.0
    %1837 = vmatprep.subr.mxu0 0.0
    %v1838 = vand.u32 %v10, 4294901760
    %v1839 = vsub.f32 %v10, %v1838
    %v1840 = vand.u32 %v1839, 4294901760
    %1841 = vmatpush1.msra.mxu0 %v1840
    %1842 = vmatprep.subr.mxu0 0.0
    %v1843 = vand.u32 %v9, 4294901760
    %v1844 = vsub.f32 %v9, %v1843
    %v1845 = vand.u32 %v1844, 4294901760
    %1846 = vmatpush1.msra.mxu0 %v1845
    %1847 = vmatprep.subr.mxu0 0.0
    %1848 = vmatpush2.msra.mxu0 0.0
    %1849 = vmatprep.subr.mxu0 0.0
    %1850 = vmatpush2.msra.mxu0 0.0
    %1851 = vmatprep.subr.mxu0 0.0
    %1852 = vmatpush2.msra.mxu0 0.0
    %1853 = vmatprep.subr.mxu0 0.0
    %1854 = vmatpush2.msra.mxu0 0.0
    %1855 = vmatprep.subr.mxu0 0.0
    %1856 = vmatpush2.msra.mxu0 0.0
    %1857 = vmatprep.subr.mxu0 0.0
    %1858 = vmatpush2.msra.mxu0 0.0
    %1859 = vmatprep.subr.mxu0 0.0
    %1860 = vmatpush2.msra.mxu0 0.0
    %1861 = vmatprep.subr.mxu0 0.0
    %1862 = vmatpush2.msra.mxu0 0.0
    %1863 = vmatprep.subr.mxu0 0.0
    %1864 = vmatpush2.msra.mxu0 0.0
    %1865 = vmatprep.subr.mxu0 0.0
    %1866 = vmatpush2.msra.mxu0 0.0
    %1867 = vmatprep.subr.mxu0 0.0
    %1868 = vmatpush2.msra.mxu0 0.0
    %1869 = vmatprep.subr.mxu0 0.0
    %1870 = vmatpush2.msra.mxu0 0.0
    %1871 = vmatprep.subr.mxu0 0.0
    %1872 = vmatpush2.msra.mxu0 0.0
    %1873 = vmatprep.subr.mxu0 0.0
    %1874 = vmatpush2.msra.mxu0 0.0
    %1875 = vmatprep.subr.mxu0 0.0
    %1876 = vmatpush2.msra.mxu0 0.0
    %1877 = vmatprep.subr.mxu0 0.0
    %1878 = vmatpush2.msra.mxu0 0.0
    %1879 = vmatprep.mubr.f32.mxu0 0.0
    %v1880 = vand.u32 %v1498, 4294901760
    %1881 = vmatmul.mubr.f32.gmra.mxu0 %v1880
    %v1882 = vpop.f32.mrf.mxu0
    %v1883 = vadd.f32 %v1806, %v1882
    %v1884 = vpop.f32.mrf.mxu0
    %1885 = vdwg.mxu0
    %1886 = vmatprep.subr.mxu0 0.0
    %1887 = vmatpush1.msra.mxu0 0.0
    %1888 = vmatprep.subr.mxu0 0.0
    %1889 = vmatpush1.msra.mxu0 0.0
    %1890 = vmatprep.subr.mxu0 0.0
    %1891 = vmatpush1.msra.mxu0 0.0
    %1892 = vmatprep.subr.mxu0 0.0
    %1893 = vmatpush1.msra.mxu0 0.0
    %1894 = vmatprep.subr.mxu0 0.0
    %1895 = vmatpush1.msra.mxu0 0.0
    %1896 = vmatprep.subr.mxu0 0.0
    %1897 = vmatpush1.msra.mxu0 0.0
    %1898 = vmatprep.subr.mxu0 0.0
    %1899 = vmatpush1.msra.mxu0 0.0
    %1900 = vmatprep.subr.mxu0 0.0
    %1901 = vmatpush1.msra.mxu0 0.0
    %1902 = vmatprep.subr.mxu0 0.0
    %1903 = vmatpush1.msra.mxu0 0.0
    %1904 = vmatprep.subr.mxu0 0.0
    %1905 = vmatpush1.msra.mxu0 0.0
    %1906 = vmatprep.subr.mxu0 0.0
    %1907 = vmatpush1.msra.mxu0 0.0
    %1908 = vmatprep.subr.mxu0 0.0
    %1909 = vmatpush1.msra.mxu0 0.0
    %1910 = vmatprep.subr.mxu0 0.0
    %1911 = vmatpush1.msra.mxu0 0.0
    %1912 = vmatprep.subr.mxu0 0.0
    %1913 = vmatpush1.msra.mxu0 0.0
    %1914 = vmatprep.subr.mxu0 0.0
    %v1915 = vand.u32 %v10, 4294901760
    %1916 = vmatpush1.msra.mxu0 %v1915
    %1917 = vmatprep.subr.mxu0 0.0
    %v1918 = vand.u32 %v9, 4294901760
    %1919 = vmatpush1.msra.mxu0 %v1918
    %1920 = vmatprep.subr.mxu0 0.0
    %1921 = vmatpush2.msra.mxu0 0.0
    %1922 = vmatprep.subr.mxu0 0.0
    %1923 = vmatpush2.msra.mxu0 0.0
    %1924 = vmatprep.subr.mxu0 0.0
    %1925 = vmatpush2.msra.mxu0 0.0
    %1926 = vmatprep.subr.mxu0 0.0
    %1927 = vmatpush2.msra.mxu0 0.0
    %1928 = vmatprep.subr.mxu0 0.0
    %1929 = vmatpush2.msra.mxu0 0.0
    %1930 = vmatprep.subr.mxu0 0.0
    %1931 = vmatpush2.msra.mxu0 0.0
    %1932 = vmatprep.subr.mxu0 0.0
    %1933 = vmatpush2.msra.mxu0 0.0
    %1934 = vmatprep.subr.mxu0 0.0
    %1935 = vmatpush2.msra.mxu0 0.0
    %1936 = vmatprep.subr.mxu0 0.0
    %1937 = vmatpush2.msra.mxu0 0.0
    %1938 = vmatprep.subr.mxu0 0.0
    %1939 = vmatpush2.msra.mxu0 0.0
    %1940 = vmatprep.subr.mxu0 0.0
    %1941 = vmatpush2.msra.mxu0 0.0
    %1942 = vmatprep.subr.mxu0 0.0
    %1943 = vmatpush2.msra.mxu0 0.0
    %1944 = vmatprep.subr.mxu0 0.0
    %1945 = vmatpush2.msra.mxu0 0.0
    %1946 = vmatprep.subr.mxu0 0.0
    %1947 = vmatpush2.msra.mxu0 0.0
    %1948 = vmatprep.subr.mxu0 0.0
    %1949 = vmatpush2.msra.mxu0 0.0
    %1950 = vmatprep.subr.mxu0 0.0
    %1951 = vmatpush2.msra.mxu0 0.0
    %1952 = vmatprep.mubr.f32.mxu0 0.0
    %v1953 = vand.u32 %v1498, 4294901760
    %1954 = vmatmul.mubr.f32.gmra.mxu0 %v1953
    %v1955 = vpop.f32.mrf.mxu0
    %v1956 = vadd.f32 %v1883, %v1955
    %v1957 = vpop.f32.mrf.mxu0
    %1958 = vdwg.mxu0
    %v1959 = vmul.f32 %v1956, %v1956
    %v1960 = vsel %vm88, %v1959, 0.0
    %1961 = vadd.xlane.f32.xlu0 %v1960
    %v1962 = vpop.xlane.xlu0 %1961
    %v1963 = vrot.slane %v1962, 4
    %v1964 = vadd.f32 %v1962, %v1963
    %v1965 = vrot.slane %v1964, 2
    %v1966 = vadd.f32 %v1964, %v1965
    %v1967 = vrot.slane %v1966, 1
    %v1968 = vadd.f32 %v1966, %v1967
    %s1969 = vtos %v1968
    %v1970 = vstv %s1969
    %v1971 = vrsqrt.pop %v1970
    %v1972 = vmul.f32 %v1970, %v1971
    %vm1973 = vcmp.eq.f32.partialorder %v1970, inf
    %v1974 = vsel %vm1973, %v1970, %v1972
    %vm1975 = vcmp.eq.f32.partialorder %v1970, 0.0
    %v1976 = vand.u32 %v1970, 2147483648
    %v1977 = vsel %vm1975, %v1976, %v1974
    %s1978 = vtos %v1977
    %s1979 = smul.f32 %s86, 0.5263158
    %s1980 = smax.f32 %s1978, %s1979
    %p1981 = scmp.gt.f32.partialorder %s86, 0.0
    %s1982 = scalar_select %p1981, %s1980, 1.0
    %v1983 = vstv %s1982
    %v1984 = vrcp.pop %v1983
    %s1985 = vtos %v1984
    %s1986 = scalar_select %p1981, %s1985, 0.0
    %v1987 = vstv %s1986
    %v1988 = vmul.f32 %v1987, %v27
    %v1989 = vlaneseq
    %v1990 = vshrl.u32 %v1989, 7
    %v1991 = vlaneseq
    %v1992 = vand.u32 %v1991, 127
    %vm1993 = vcmp.eq.s32.totalorder %v1990, %v1992
    %v1994 = vsel %vm1993, 1, 0
    %v1995 = vcvt.s32.f32 %v1994
    %s1996 = scalar_select %p1981, inf, 0.0
    // While loop
    $region6: #{tpu_custom_call.1} parent=1 // loop_pre_header
      _
    $region7: #{tpu_custom_call.1} parent=1 // loop_header
      %s1998 = sphi 0, %s2931
      %v1999 = vphi %v1988, %v2928
      %s2000 = sphi %s1996, %s2480
      %p2001 = scmp.lt.s32.totalorder %s1998, 20
      %p2002 = scmp.gt.f32.partialorder %s2000, 1e-06
      %p2003 = pnand %p2001, %p2002
      %p2004 = pneg %p2003
    $region8: #{tpu_custom_call.1} parent=1 // loop_header_branch
      %2006 = sbr.rel (%p2003) target = $region12
    $region9: #{tpu_custom_call.1} parent=1 // loop_body
      %v2008 = vsel %vm561, %v1999, 0
      %2010 = vmatprep.subr.mxu0 0.0
      %2011 = vmatpush1.msra.mxu0 0.0
      %2012 = vmatprep.subr.mxu0 0.0
      %2013 = vmatpush1.msra.mxu0 0.0
      %2014 = vmatprep.subr.mxu0 0.0
      %2015 = vmatpush1.msra.mxu0 0.0
      %2016 = vmatprep.subr.mxu0 0.0
      %2017 = vmatpush1.msra.mxu0 0.0
      %2018 = vmatprep.subr.mxu0 0.0
      %2019 = vmatpush1.msra.mxu0 0.0
      %2020 = vmatprep.subr.mxu0 0.0
      %2021 = vmatpush1.msra.mxu0 0.0
      %2022 = vmatprep.subr.mxu0 0.0
      %2023 = vmatpush1.msra.mxu0 0.0
      %2024 = vmatprep.subr.mxu0 0.0
      %2025 = vmatpush1.msra.mxu0 0.0
      %2026 = vmatprep.subr.mxu0 0.0
      %2027 = vmatpush1.msra.mxu0 0.0
      %2028 = vmatprep.subr.mxu0 0.0
      %2029 = vmatpush1.msra.mxu0 0.0
      %2030 = vmatprep.subr.mxu0 0.0
      %2031 = vmatpush1.msra.mxu0 0.0
      %2032 = vmatprep.subr.mxu0 0.0
      %2033 = vmatpush1.msra.mxu0 0.0
      %2034 = vmatprep.subr.mxu0 0.0
      %2035 = vmatpush1.msra.mxu0 0.0
      %2036 = vmatprep.subr.mxu0 0.0
      %2037 = vmatpush1.msra.mxu0 0.0
      %2038 = vmatprep.subr.mxu0 0.0
      %v2039 = vand.u32 %v10, 4294901760
      %2040 = vmatpush1.msra.mxu0 %v2039
      %2041 = vmatprep.subr.mxu0 0.0
      %v2042 = vand.u32 %v9, 4294901760
      %2043 = vmatpush1.msra.mxu0 %v2042
      %2044 = vmatprep.subr.mxu0 0.0
      %2045 = vmatpush2.msra.mxu0 0.0
      %2046 = vmatprep.subr.mxu0 0.0
      %2047 = vmatpush2.msra.mxu0 0.0
      %2048 = vmatprep.subr.mxu0 0.0
      %2049 = vmatpush2.msra.mxu0 0.0
      %2050 = vmatprep.subr.mxu0 0.0
      %2051 = vmatpush2.msra.mxu0 0.0
      %2052 = vmatprep.subr.mxu0 0.0
      %2053 = vmatpush2.msra.mxu0 0.0
      %2054 = vmatprep.subr.mxu0 0.0
      %2055 = vmatpush2.msra.mxu0 0.0
      %2056 = vmatprep.subr.mxu0 0.0
      %2057 = vmatpush2.msra.mxu0 0.0
      %2058 = vmatprep.subr.mxu0 0.0
      %2059 = vmatpush2.msra.mxu0 0.0
      %2060 = vmatprep.subr.mxu0 0.0
      %2061 = vmatpush2.msra.mxu0 0.0
      %2062 = vmatprep.subr.mxu0 0.0
      %2063 = vmatpush2.msra.mxu0 0.0
      %2064 = vmatprep.subr.mxu0 0.0
      %2065 = vmatpush2.msra.mxu0 0.0
      %2066 = vmatprep.subr.mxu0 0.0
      %2067 = vmatpush2.msra.mxu0 0.0
      %2068 = vmatprep.subr.mxu0 0.0
      %2069 = vmatpush2.msra.mxu0 0.0
      %2070 = vmatprep.subr.mxu0 0.0
      %2071 = vmatpush2.msra.mxu0 0.0
      %2072 = vmatprep.subr.mxu0 0.0
      %2073 = vmatpush2.msra.mxu0 0.0
      %2074 = vmatprep.subr.mxu0 0.0
      %2075 = vmatpush2.msra.mxu0 0.0
      %2076 = vmatprep.mubr.f32.mxu0 0.0
      %v2077 = vand.u32 %v2008, 4294901760
      %v2078 = vsub.f32 %v2008, %v2077
      %v2079 = vand.u32 %v2078, 4294901760
      %v2080 = vsub.f32 %v2078, %v2079
      %v2081 = vand.u32 %v2080, 4294901760
      %2082 = vmatmul.mubr.f32.gmra.mxu0 %v2081
      %v2083 = vpop.f32.mrf.mxu0
      %v2084 = vadd.f32 0.0, %v2083
      %v2085 = vpop.f32.mrf.mxu0
      %2086 = vdwg.mxu0
      %2087 = vmatprep.subr.mxu0 0.0
      %2088 = vmatpush1.msra.mxu0 0.0
      %2089 = vmatprep.subr.mxu0 0.0
      %2090 = vmatpush1.msra.mxu0 0.0
      %2091 = vmatprep.subr.mxu0 0.0
      %2092 = vmatpush1.msra.mxu0 0.0
      %2093 = vmatprep.subr.mxu0 0.0
      %2094 = vmatpush1.msra.mxu0 0.0
      %2095 = vmatprep.subr.mxu0 0.0
      %2096 = vmatpush1.msra.mxu0 0.0
      %2097 = vmatprep.subr.mxu0 0.0
      %2098 = vmatpush1.msra.mxu0 0.0
      %2099 = vmatprep.subr.mxu0 0.0
      %2100 = vmatpush1.msra.mxu0 0.0
      %2101 = vmatprep.subr.mxu0 0.0
      %2102 = vmatpush1.msra.mxu0 0.0
      %2103 = vmatprep.subr.mxu0 0.0
      %2104 = vmatpush1.msra.mxu0 0.0
      %2105 = vmatprep.subr.mxu0 0.0
      %2106 = vmatpush1.msra.mxu0 0.0
      %2107 = vmatprep.subr.mxu0 0.0
      %2108 = vmatpush1.msra.mxu0 0.0
      %2109 = vmatprep.subr.mxu0 0.0
      %2110 = vmatpush1.msra.mxu0 0.0
      %2111 = vmatprep.subr.mxu0 0.0
      %2112 = vmatpush1.msra.mxu0 0.0
      %2113 = vmatprep.subr.mxu0 0.0
      %2114 = vmatpush1.msra.mxu0 0.0
      %2115 = vmatprep.subr.mxu0 0.0
      %v2116 = vand.u32 %v10, 4294901760
      %v2117 = vsub.f32 %v10, %v2116
      %v2118 = vand.u32 %v2117, 4294901760
      %v2119 = vsub.f32 %v2117, %v2118
      %v2120 = vand.u32 %v2119, 4294901760
      %2121 = vmatpush1.msra.mxu0 %v2120
      %2122 = vmatprep.subr.mxu0 0.0
      %v2123 = vand.u32 %v9, 4294901760
      %v2124 = vsub.f32 %v9, %v2123
      %v2125 = vand.u32 %v2124, 4294901760
      %v2126 = vsub.f32 %v2124, %v2125
      %v2127 = vand.u32 %v2126, 4294901760
      %2128 = vmatpush1.msra.mxu0 %v2127
      %2129 = vmatprep.subr.mxu0 0.0
      %2130 = vmatpush2.msra.mxu0 0.0
      %2131 = vmatprep.subr.mxu0 0.0
      %2132 = vmatpush2.msra.mxu0 0.0
      %2133 = vmatprep.subr.mxu0 0.0
      %2134 = vmatpush2.msra.mxu0 0.0
      %2135 = vmatprep.subr.mxu0 0.0
      %2136 = vmatpush2.msra.mxu0 0.0
      %2137 = vmatprep.subr.mxu0 0.0
      %2138 = vmatpush2.msra.mxu0 0.0
      %2139 = vmatprep.subr.mxu0 0.0
      %2140 = vmatpush2.msra.mxu0 0.0
      %2141 = vmatprep.subr.mxu0 0.0
      %2142 = vmatpush2.msra.mxu0 0.0
      %2143 = vmatprep.subr.mxu0 0.0
      %2144 = vmatpush2.msra.mxu0 0.0
      %2145 = vmatprep.subr.mxu0 0.0
      %2146 = vmatpush2.msra.mxu0 0.0
      %2147 = vmatprep.subr.mxu0 0.0
      %2148 = vmatpush2.msra.mxu0 0.0
      %2149 = vmatprep.subr.mxu0 0.0
      %2150 = vmatpush2.msra.mxu0 0.0
      %2151 = vmatprep.subr.mxu0 0.0
      %2152 = vmatpush2.msra.mxu0 0.0
      %2153 = vmatprep.subr.mxu0 0.0
      %2154 = vmatpush2.msra.mxu0 0.0
      %2155 = vmatprep.subr.mxu0 0.0
      %2156 = vmatpush2.msra.mxu0 0.0
      %2157 = vmatprep.subr.mxu0 0.0
      %2158 = vmatpush2.msra.mxu0 0.0
      %2159 = vmatprep.subr.mxu0 0.0
      %2160 = vmatpush2.msra.mxu0 0.0
      %2161 = vmatprep.mubr.f32.mxu0 0.0
      %v2162 = vand.u32 %v2008, 4294901760
      %2163 = vmatmul.mubr.f32.gmra.mxu0 %v2162
      %v2164 = vpop.f32.mrf.mxu0
      %v2165 = vadd.f32 %v2084, %v2164
      %v2166 = vpop.f32.mrf.mxu0
      %2167 = vdwg.mxu0
      %2168 = vmatprep.subr.mxu0 0.0
      %2169 = vmatpush1.msra.mxu0 0.0
      %2170 = vmatprep.subr.mxu0 0.0
      %2171 = vmatpush1.msra.mxu0 0.0
      %2172 = vmatprep.subr.mxu0 0.0
      %2173 = vmatpush1.msra.mxu0 0.0
      %2174 = vmatprep.subr.mxu0 0.0
      %2175 = vmatpush1.msra.mxu0 0.0
      %2176 = vmatprep.subr.mxu0 0.0
      %2177 = vmatpush1.msra.mxu0 0.0
      %2178 = vmatprep.subr.mxu0 0.0
      %2179 = vmatpush1.msra.mxu0 0.0
      %2180 = vmatprep.subr.mxu0 0.0
      %2181 = vmatpush1.msra.mxu0 0.0
      %2182 = vmatprep.subr.mxu0 0.0
      %2183 = vmatpush1.msra.mxu0 0.0
      %2184 = vmatprep.subr.mxu0 0.0
      %2185 = vmatpush1.msra.mxu0 0.0
      %2186 = vmatprep.subr.mxu0 0.0
      %2187 = vmatpush1.msra.mxu0 0.0
      %2188 = vmatprep.subr.mxu0 0.0
      %2189 = vmatpush1.msra.mxu0 0.0
      %2190 = vmatprep.subr.mxu0 0.0
      %2191 = vmatpush1.msra.mxu0 0.0
      %2192 = vmatprep.subr.mxu0 0.0
      %2193 = vmatpush1.msra.mxu0 0.0
      %2194 = vmatprep.subr.mxu0 0.0
      %2195 = vmatpush1.msra.mxu0 0.0
      %2196 = vmatprep.subr.mxu0 0.0
      %v2197 = vand.u32 %v10, 4294901760
      %v2198 = vsub.f32 %v10, %v2197
      %2199 = vmatpush1.msra.mxu0 %v2198
      %2200 = vmatprep.subr.mxu0 0.0
      %v2201 = vand.u32 %v9, 4294901760
      %v2202 = vsub.f32 %v9, %v2201
      %2203 = vmatpush1.msra.mxu0 %v2202
      %2204 = vmatprep.subr.mxu0 0.0
      %2205 = vmatpush2.msra.mxu0 0.0
      %2206 = vmatprep.subr.mxu0 0.0
      %2207 = vmatpush2.msra.mxu0 0.0
      %2208 = vmatprep.subr.mxu0 0.0
      %2209 = vmatpush2.msra.mxu0 0.0
      %2210 = vmatprep.subr.mxu0 0.0
      %2211 = vmatpush2.msra.mxu0 0.0
      %2212 = vmatprep.subr.mxu0 0.0
      %2213 = vmatpush2.msra.mxu0 0.0
      %2214 = vmatprep.subr.mxu0 0.0
      %2215 = vmatpush2.msra.mxu0 0.0
      %2216 = vmatprep.subr.mxu0 0.0
      %2217 = vmatpush2.msra.mxu0 0.0
      %2218 = vmatprep.subr.mxu0 0.0
      %2219 = vmatpush2.msra.mxu0 0.0
      %2220 = vmatprep.subr.mxu0 0.0
      %2221 = vmatpush2.msra.mxu0 0.0
      %2222 = vmatprep.subr.mxu0 0.0
      %2223 = vmatpush2.msra.mxu0 0.0
      %2224 = vmatprep.subr.mxu0 0.0
      %2225 = vmatpush2.msra.mxu0 0.0
      %2226 = vmatprep.subr.mxu0 0.0
      %2227 = vmatpush2.msra.mxu0 0.0
      %2228 = vmatprep.subr.mxu0 0.0
      %2229 = vmatpush2.msra.mxu0 0.0
      %2230 = vmatprep.subr.mxu0 0.0
      %2231 = vmatpush2.msra.mxu0 0.0
      %2232 = vmatprep.subr.mxu0 0.0
      %2233 = vmatpush2.msra.mxu0 0.0
      %2234 = vmatprep.subr.mxu0 0.0
      %2235 = vmatpush2.msra.mxu0 0.0
      %2236 = vmatprep.mubr.f32.mxu0 0.0
      %v2237 = vand.u32 %v2008, 4294901760
      %v2238 = vsub.f32 %v2008, %v2237
      %2239 = vmatmul.mubr.f32.gmra.mxu0 %v2238
      %v2240 = vpop.f32.mrf.mxu0
      %v2241 = vadd.f32 %v2165, %v2240
      %v2242 = vpop.f32.mrf.mxu0
      %2243 = vdwg.mxu0
      %2244 = vmatprep.subr.mxu0 0.0
      %2245 = vmatpush1.msra.mxu0 0.0
      %2246 = vmatprep.subr.mxu0 0.0
      %2247 = vmatpush1.msra.mxu0 0.0
      %2248 = vmatprep.subr.mxu0 0.0
      %2249 = vmatpush1.msra.mxu0 0.0
      %2250 = vmatprep.subr.mxu0 0.0
      %2251 = vmatpush1.msra.mxu0 0.0
      %2252 = vmatprep.subr.mxu0 0.0
      %2253 = vmatpush1.msra.mxu0 0.0
      %2254 = vmatprep.subr.mxu0 0.0
      %2255 = vmatpush1.msra.mxu0 0.0
      %2256 = vmatprep.subr.mxu0 0.0
      %2257 = vmatpush1.msra.mxu0 0.0
      %2258 = vmatprep.subr.mxu0 0.0
      %2259 = vmatpush1.msra.mxu0 0.0
      %2260 = vmatprep.subr.mxu0 0.0
      %2261 = vmatpush1.msra.mxu0 0.0
      %2262 = vmatprep.subr.mxu0 0.0
      %2263 = vmatpush1.msra.mxu0 0.0
      %2264 = vmatprep.subr.mxu0 0.0
      %2265 = vmatpush1.msra.mxu0 0.0
      %2266 = vmatprep.subr.mxu0 0.0
      %2267 = vmatpush1.msra.mxu0 0.0
      %2268 = vmatprep.subr.mxu0 0.0
      %2269 = vmatpush1.msra.mxu0 0.0
      %2270 = vmatprep.subr.mxu0 0.0
      %2271 = vmatpush1.msra.mxu0 0.0
      %2272 = vmatprep.subr.mxu0 0.0
      %v2273 = vand.u32 %v10, 4294901760
      %2274 = vmatpush1.msra.mxu0 %v2273
      %2275 = vmatprep.subr.mxu0 0.0
      %v2276 = vand.u32 %v9, 4294901760
      %2277 = vmatpush1.msra.mxu0 %v2276
      %2278 = vmatprep.subr.mxu0 0.0
      %2279 = vmatpush2.msra.mxu0 0.0
      %2280 = vmatprep.subr.mxu0 0.0
      %2281 = vmatpush2.msra.mxu0 0.0
      %2282 = vmatprep.subr.mxu0 0.0
      %2283 = vmatpush2.msra.mxu0 0.0
      %2284 = vmatprep.subr.mxu0 0.0
      %2285 = vmatpush2.msra.mxu0 0.0
      %2286 = vmatprep.subr.mxu0 0.0
      %2287 = vmatpush2.msra.mxu0 0.0
      %2288 = vmatprep.subr.mxu0 0.0
      %2289 = vmatpush2.msra.mxu0 0.0
      %2290 = vmatprep.subr.mxu0 0.0
      %2291 = vmatpush2.msra.mxu0 0.0
      %2292 = vmatprep.subr.mxu0 0.0
      %2293 = vmatpush2.msra.mxu0 0.0
      %2294 = vmatprep.subr.mxu0 0.0
      %2295 = vmatpush2.msra.mxu0 0.0
      %2296 = vmatprep.subr.mxu0 0.0
      %2297 = vmatpush2.msra.mxu0 0.0
      %2298 = vmatprep.subr.mxu0 0.0
      %2299 = vmatpush2.msra.mxu0 0.0
      %2300 = vmatprep.subr.mxu0 0.0
      %2301 = vmatpush2.msra.mxu0 0.0
      %2302 = vmatprep.subr.mxu0 0.0
      %2303 = vmatpush2.msra.mxu0 0.0
      %2304 = vmatprep.subr.mxu0 0.0
      %2305 = vmatpush2.msra.mxu0 0.0
      %2306 = vmatprep.subr.mxu0 0.0
      %2307 = vmatpush2.msra.mxu0 0.0
      %2308 = vmatprep.subr.mxu0 0.0
      %2309 = vmatpush2.msra.mxu0 0.0
      %2310 = vmatprep.mubr.f32.mxu0 0.0
      %v2311 = vand.u32 %v2008, 4294901760
      %v2312 = vsub.f32 %v2008, %v2311
      %v2313 = vand.u32 %v2312, 4294901760
      %2314 = vmatmul.mubr.f32.gmra.mxu0 %v2313
      %v2315 = vpop.f32.mrf.mxu0
      %v2316 = vadd.f32 %v2241, %v2315
      %v2317 = vpop.f32.mrf.mxu0
      %2318 = vdwg.mxu0
      %2319 = vmatprep.subr.mxu0 0.0
      %2320 = vmatpush1.msra.mxu0 0.0
      %2321 = vmatprep.subr.mxu0 0.0
      %2322 = vmatpush1.msra.mxu0 0.0
      %2323 = vmatprep.subr.mxu0 0.0
      %2324 = vmatpush1.msra.mxu0 0.0
      %2325 = vmatprep.subr.mxu0 0.0
      %2326 = vmatpush1.msra.mxu0 0.0
      %2327 = vmatprep.subr.mxu0 0.0
      %2328 = vmatpush1.msra.mxu0 0.0
      %2329 = vmatprep.subr.mxu0 0.0
      %2330 = vmatpush1.msra.mxu0 0.0
      %2331 = vmatprep.subr.mxu0 0.0
      %2332 = vmatpush1.msra.mxu0 0.0
      %2333 = vmatprep.subr.mxu0 0.0
      %2334 = vmatpush1.msra.mxu0 0.0
      %2335 = vmatprep.subr.mxu0 0.0
      %2336 = vmatpush1.msra.mxu0 0.0
      %2337 = vmatprep.subr.mxu0 0.0
      %2338 = vmatpush1.msra.mxu0 0.0
      %2339 = vmatprep.subr.mxu0 0.0
      %2340 = vmatpush1.msra.mxu0 0.0
      %2341 = vmatprep.subr.mxu0 0.0
      %2342 = vmatpush1.msra.mxu0 0.0
      %2343 = vmatprep.subr.mxu0 0.0
      %2344 = vmatpush1.msra.mxu0 0.0
      %2345 = vmatprep.subr.mxu0 0.0
      %2346 = vmatpush1.msra.mxu0 0.0
      %2347 = vmatprep.subr.mxu0 0.0
      %v2348 = vand.u32 %v10, 4294901760
      %v2349 = vsub.f32 %v10, %v2348
      %v2350 = vand.u32 %v2349, 4294901760
      %2351 = vmatpush1.msra.mxu0 %v2350
      %2352 = vmatprep.subr.mxu0 0.0
      %v2353 = vand.u32 %v9, 4294901760
      %v2354 = vsub.f32 %v9, %v2353
      %v2355 = vand.u32 %v2354, 4294901760
      %2356 = vmatpush1.msra.mxu0 %v2355
      %2357 = vmatprep.subr.mxu0 0.0
      %2358 = vmatpush2.msra.mxu0 0.0
      %2359 = vmatprep.subr.mxu0 0.0
      %2360 = vmatpush2.msra.mxu0 0.0
      %2361 = vmatprep.subr.mxu0 0.0
      %2362 = vmatpush2.msra.mxu0 0.0
      %2363 = vmatprep.subr.mxu0 0.0
      %2364 = vmatpush2.msra.mxu0 0.0
      %2365 = vmatprep.subr.mxu0 0.0
      %2366 = vmatpush2.msra.mxu0 0.0
      %2367 = vmatprep.subr.mxu0 0.0
      %2368 = vmatpush2.msra.mxu0 0.0
      %2369 = vmatprep.subr.mxu0 0.0
      %2370 = vmatpush2.msra.mxu0 0.0
      %2371 = vmatprep.subr.mxu0 0.0
      %2372 = vmatpush2.msra.mxu0 0.0
      %2373 = vmatprep.subr.mxu0 0.0
      %2374 = vmatpush2.msra.mxu0 0.0
      %2375 = vmatprep.subr.mxu0 0.0
      %2376 = vmatpush2.msra.mxu0 0.0
      %2377 = vmatprep.subr.mxu0 0.0
      %2378 = vmatpush2.msra.mxu0 0.0
      %2379 = vmatprep.subr.mxu0 0.0
      %2380 = vmatpush2.msra.mxu0 0.0
      %2381 = vmatprep.subr.mxu0 0.0
      %2382 = vmatpush2.msra.mxu0 0.0
      %2383 = vmatprep.subr.mxu0 0.0
      %2384 = vmatpush2.msra.mxu0 0.0
      %2385 = vmatprep.subr.mxu0 0.0
      %2386 = vmatpush2.msra.mxu0 0.0
      %2387 = vmatprep.subr.mxu0 0.0
      %2388 = vmatpush2.msra.mxu0 0.0
      %2389 = vmatprep.mubr.f32.mxu0 0.0
      %v2390 = vand.u32 %v2008, 4294901760
      %2391 = vmatmul.mubr.f32.gmra.mxu0 %v2390
      %v2392 = vpop.f32.mrf.mxu0
      %v2393 = vadd.f32 %v2316, %v2392
      %v2394 = vpop.f32.mrf.mxu0
      %2395 = vdwg.mxu0
      %2396 = vmatprep.subr.mxu0 0.0
      %2397 = vmatpush1.msra.mxu0 0.0
      %2398 = vmatprep.subr.mxu0 0.0
      %2399 = vmatpush1.msra.mxu0 0.0
      %2400 = vmatprep.subr.mxu0 0.0
      %2401 = vmatpush1.msra.mxu0 0.0
      %2402 = vmatprep.subr.mxu0 0.0
      %2403 = vmatpush1.msra.mxu0 0.0
      %2404 = vmatprep.subr.mxu0 0.0
      %2405 = vmatpush1.msra.mxu0 0.0
      %2406 = vmatprep.subr.mxu0 0.0
      %2407 = vmatpush1.msra.mxu0 0.0
      %2408 = vmatprep.subr.mxu0 0.0
      %2409 = vmatpush1.msra.mxu0 0.0
      %2410 = vmatprep.subr.mxu0 0.0
      %2411 = vmatpush1.msra.mxu0 0.0
      %2412 = vmatprep.subr.mxu0 0.0
      %2413 = vmatpush1.msra.mxu0 0.0
      %2414 = vmatprep.subr.mxu0 0.0
      %2415 = vmatpush1.msra.mxu0 0.0
      %2416 = vmatprep.subr.mxu0 0.0
      %2417 = vmatpush1.msra.mxu0 0.0
      %2418 = vmatprep.subr.mxu0 0.0
      %2419 = vmatpush1.msra.mxu0 0.0
      %2420 = vmatprep.subr.mxu0 0.0
      %2421 = vmatpush1.msra.mxu0 0.0
      %2422 = vmatprep.subr.mxu0 0.0
      %2423 = vmatpush1.msra.mxu0 0.0
      %2424 = vmatprep.subr.mxu0 0.0
      %v2425 = vand.u32 %v10, 4294901760
      %2426 = vmatpush1.msra.mxu0 %v2425
      %2427 = vmatprep.subr.mxu0 0.0
      %v2428 = vand.u32 %v9, 4294901760
      %2429 = vmatpush1.msra.mxu0 %v2428
      %2430 = vmatprep.subr.mxu0 0.0
      %2431 = vmatpush2.msra.mxu0 0.0
      %2432 = vmatprep.subr.mxu0 0.0
      %2433 = vmatpush2.msra.mxu0 0.0
      %2434 = vmatprep.subr.mxu0 0.0
      %2435 = vmatpush2.msra.mxu0 0.0
      %2436 = vmatprep.subr.mxu0 0.0
      %2437 = vmatpush2.msra.mxu0 0.0
      %2438 = vmatprep.subr.mxu0 0.0
      %2439 = vmatpush2.msra.mxu0 0.0
      %2440 = vmatprep.subr.mxu0 0.0
      %2441 = vmatpush2.msra.mxu0 0.0
      %2442 = vmatprep.subr.mxu0 0.0
      %2443 = vmatpush2.msra.mxu0 0.0
      %2444 = vmatprep.subr.mxu0 0.0
      %2445 = vmatpush2.msra.mxu0 0.0
      %2446 = vmatprep.subr.mxu0 0.0
      %2447 = vmatpush2.msra.mxu0 0.0
      %2448 = vmatprep.subr.mxu0 0.0
      %2449 = vmatpush2.msra.mxu0 0.0
      %2450 = vmatprep.subr.mxu0 0.0
      %2451 = vmatpush2.msra.mxu0 0.0
      %2452 = vmatprep.subr.mxu0 0.0
      %2453 = vmatpush2.msra.mxu0 0.0
      %2454 = vmatprep.subr.mxu0 0.0
      %2455 = vmatpush2.msra.mxu0 0.0
      %2456 = vmatprep.subr.mxu0 0.0
      %2457 = vmatpush2.msra.mxu0 0.0
      %2458 = vmatprep.subr.mxu0 0.0
      %2459 = vmatpush2.msra.mxu0 0.0
      %2460 = vmatprep.subr.mxu0 0.0
      %2461 = vmatpush2.msra.mxu0 0.0
      %2462 = vmatprep.mubr.f32.mxu0 0.0
      %v2463 = vand.u32 %v2008, 4294901760
      %2464 = vmatmul.mubr.f32.gmra.mxu0 %v2463
      %v2465 = vpop.f32.mrf.mxu0
      %v2466 = vadd.f32 %v2393, %v2465
      %v2467 = vpop.f32.mrf.mxu0
      %2468 = vdwg.mxu0
      %v2469 = vsub.f32 %v1995, %v2466
      %v2470 = vmul.f32 %v2469, %v2469
      %v2471 = vsel %vm45, %v2470, 0.0
      %2472 = vadd.xlane.f32.xlu0 %v2471
      %v2473 = vpop.xlane.xlu0 %2472
      %v2474 = vrot.slane %v2473, 4
      %v2475 = vadd.f32 %v2473, %v2474
      %v2476 = vrot.slane %v2475, 2
      %v2477 = vadd.f32 %v2475, %v2476
      %v2478 = vrot.slane %v2477, 1
      %v2479 = vadd.f32 %v2477, %v2478
      %s2480 = vtos %v2479
      %v2481 = vadd.f32 %v1995, %v2469
      %v2483 = vsel %vm45, %v2481, 0
      %2485 = vmatprep.subr.mxu0 0.0
      %2486 = vmatpush1.msra.mxu0 0.0
      %2487 = vmatprep.subr.mxu0 0.0
      %2488 = vmatpush1.msra.mxu0 0.0
      %2489 = vmatprep.subr.mxu0 0.0
      %2490 = vmatpush1.msra.mxu0 0.0
      %2491 = vmatprep.subr.mxu0 0.0
      %2492 = vmatpush1.msra.mxu0 0.0
      %2493 = vmatprep.subr.mxu0 0.0
      %2494 = vmatpush1.msra.mxu0 0.0
      %2495 = vmatprep.subr.mxu0 0.0
      %2496 = vmatpush1.msra.mxu0 0.0
      %2497 = vmatprep.subr.mxu0 0.0
      %2498 = vmatpush1.msra.mxu0 0.0
      %2499 = vmatprep.subr.mxu0 0.0
      %2500 = vmatpush1.msra.mxu0 0.0
      %2501 = vmatprep.subr.mxu0 0.0
      %2502 = vmatpush1.msra.mxu0 0.0
      %2503 = vmatprep.subr.mxu0 0.0
      %2504 = vmatpush1.msra.mxu0 0.0
      %2505 = vmatprep.subr.mxu0 0.0
      %2506 = vmatpush1.msra.mxu0 0.0
      %2507 = vmatprep.subr.mxu0 0.0
      %2508 = vmatpush1.msra.mxu0 0.0
      %2509 = vmatprep.subr.mxu0 0.0
      %2510 = vmatpush1.msra.mxu0 0.0
      %2511 = vmatprep.subr.mxu0 0.0
      %2512 = vmatpush1.msra.mxu0 0.0
      %2513 = vmatprep.subr.mxu0 0.0
      %2514 = vmatpush1.msra.mxu0 0.0
      %2515 = vmatprep.subr.mxu0 0.0
      %v2516 = vand.u32 %v1999, 4294901760
      %2517 = vmatpush1.msra.mxu0 %v2516
      %2518 = vmatprep.subr.mxu0 0.0
      %2519 = vmatpush2.msra.mxu0 0.0
      %2520 = vmatprep.subr.mxu0 0.0
      %2521 = vmatpush2.msra.mxu0 0.0
      %2522 = vmatprep.subr.mxu0 0.0
      %2523 = vmatpush2.msra.mxu0 0.0
      %2524 = vmatprep.subr.mxu0 0.0
      %2525 = vmatpush2.msra.mxu0 0.0
      %2526 = vmatprep.subr.mxu0 0.0
      %2527 = vmatpush2.msra.mxu0 0.0
      %2528 = vmatprep.subr.mxu0 0.0
      %2529 = vmatpush2.msra.mxu0 0.0
      %2530 = vmatprep.subr.mxu0 0.0
      %2531 = vmatpush2.msra.mxu0 0.0
      %2532 = vmatprep.subr.mxu0 0.0
      %2533 = vmatpush2.msra.mxu0 0.0
      %2534 = vmatprep.subr.mxu0 0.0
      %2535 = vmatpush2.msra.mxu0 0.0
      %2536 = vmatprep.subr.mxu0 0.0
      %2537 = vmatpush2.msra.mxu0 0.0
      %2538 = vmatprep.subr.mxu0 0.0
      %2539 = vmatpush2.msra.mxu0 0.0
      %2540 = vmatprep.subr.mxu0 0.0
      %2541 = vmatpush2.msra.mxu0 0.0
      %2542 = vmatprep.subr.mxu0 0.0
      %2543 = vmatpush2.msra.mxu0 0.0
      %2544 = vmatprep.subr.mxu0 0.0
      %2545 = vmatpush2.msra.mxu0 0.0
      %2546 = vmatprep.subr.mxu0 0.0
      %2547 = vmatpush2.msra.mxu0 0.0
      %2548 = vmatprep.subr.mxu0 0.0
      %2549 = vmatpush2.msra.mxu0 0.0
      %2550 = vmatprep.mubr.f32.mxu0 0.0
      %v2551 = vand.u32 %v2483, 4294901760
      %v2552 = vsub.f32 %v2483, %v2551
      %v2553 = vand.u32 %v2552, 4294901760
      %v2554 = vsub.f32 %v2552, %v2553
      %v2555 = vand.u32 %v2554, 4294901760
      %2556 = vmatmul.mubr.f32.gmra.mxu0 %v2555
      %v2557 = vpop.f32.mrf.mxu0
      %v2558 = vadd.f32 0.0, %v2557
      %v2559 = vpop.f32.mrf.mxu0
      %2560 = vdwg.mxu0
      %2561 = vmatprep.subr.mxu0 0.0
      %2562 = vmatpush1.msra.mxu0 0.0
      %2563 = vmatprep.subr.mxu0 0.0
      %2564 = vmatpush1.msra.mxu0 0.0
      %2565 = vmatprep.subr.mxu0 0.0
      %2566 = vmatpush1.msra.mxu0 0.0
      %2567 = vmatprep.subr.mxu0 0.0
      %2568 = vmatpush1.msra.mxu0 0.0
      %2569 = vmatprep.subr.mxu0 0.0
      %2570 = vmatpush1.msra.mxu0 0.0
      %2571 = vmatprep.subr.mxu0 0.0
      %2572 = vmatpush1.msra.mxu0 0.0
      %2573 = vmatprep.subr.mxu0 0.0
      %2574 = vmatpush1.msra.mxu0 0.0
      %2575 = vmatprep.subr.mxu0 0.0
      %2576 = vmatpush1.msra.mxu0 0.0
      %2577 = vmatprep.subr.mxu0 0.0
      %2578 = vmatpush1.msra.mxu0 0.0
      %2579 = vmatprep.subr.mxu0 0.0
      %2580 = vmatpush1.msra.mxu0 0.0
      %2581 = vmatprep.subr.mxu0 0.0
      %2582 = vmatpush1.msra.mxu0 0.0
      %2583 = vmatprep.subr.mxu0 0.0
      %2584 = vmatpush1.msra.mxu0 0.0
      %2585 = vmatprep.subr.mxu0 0.0
      %2586 = vmatpush1.msra.mxu0 0.0
      %2587 = vmatprep.subr.mxu0 0.0
      %2588 = vmatpush1.msra.mxu0 0.0
      %2589 = vmatprep.subr.mxu0 0.0
      %2590 = vmatpush1.msra.mxu0 0.0
      %2591 = vmatprep.subr.mxu0 0.0
      %v2592 = vand.u32 %v1999, 4294901760
      %v2593 = vsub.f32 %v1999, %v2592
      %v2594 = vand.u32 %v2593, 4294901760
      %v2595 = vsub.f32 %v2593, %v2594
      %v2596 = vand.u32 %v2595, 4294901760
      %2597 = vmatpush1.msra.mxu0 %v2596
      %2598 = vmatprep.subr.mxu0 0.0
      %2599 = vmatpush2.msra.mxu0 0.0
      %2600 = vmatprep.subr.mxu0 0.0
      %2601 = vmatpush2.msra.mxu0 0.0
      %2602 = vmatprep.subr.mxu0 0.0
      %2603 = vmatpush2.msra.mxu0 0.0
      %2604 = vmatprep.subr.mxu0 0.0
      %2605 = vmatpush2.msra.mxu0 0.0
      %2606 = vmatprep.subr.mxu0 0.0
      %2607 = vmatpush2.msra.mxu0 0.0
      %2608 = vmatprep.subr.mxu0 0.0
      %2609 = vmatpush2.msra.mxu0 0.0
      %2610 = vmatprep.subr.mxu0 0.0
      %2611 = vmatpush2.msra.mxu0 0.0
      %2612 = vmatprep.subr.mxu0 0.0
      %2613 = vmatpush2.msra.mxu0 0.0
      %2614 = vmatprep.subr.mxu0 0.0
      %2615 = vmatpush2.msra.mxu0 0.0
      %2616 = vmatprep.subr.mxu0 0.0
      %2617 = vmatpush2.msra.mxu0 0.0
      %2618 = vmatprep.subr.mxu0 0.0
      %2619 = vmatpush2.msra.mxu0 0.0
      %2620 = vmatprep.subr.mxu0 0.0
      %2621 = vmatpush2.msra.mxu0 0.0
      %2622 = vmatprep.subr.mxu0 0.0
      %2623 = vmatpush2.msra.mxu0 0.0
      %2624 = vmatprep.subr.mxu0 0.0
      %2625 = vmatpush2.msra.mxu0 0.0
      %2626 = vmatprep.subr.mxu0 0.0
      %2627 = vmatpush2.msra.mxu0 0.0
      %2628 = vmatprep.subr.mxu0 0.0
      %2629 = vmatpush2.msra.mxu0 0.0
      %2630 = vmatprep.mubr.f32.mxu0 0.0
      %v2631 = vand.u32 %v2483, 4294901760
      %2632 = vmatmul.mubr.f32.gmra.mxu0 %v2631
      %v2633 = vpop.f32.mrf.mxu0
      %v2634 = vadd.f32 %v2558, %v2633
      %v2635 = vpop.f32.mrf.mxu0
      %2636 = vdwg.mxu0
      %2637 = vmatprep.subr.mxu0 0.0
      %2638 = vmatpush1.msra.mxu0 0.0
      %2639 = vmatprep.subr.mxu0 0.0
      %2640 = vmatpush1.msra.mxu0 0.0
      %2641 = vmatprep.subr.mxu0 0.0
      %2642 = vmatpush1.msra.mxu0 0.0
      %2643 = vmatprep.subr.mxu0 0.0
      %2644 = vmatpush1.msra.mxu0 0.0
      %2645 = vmatprep.subr.mxu0 0.0
      %2646 = vmatpush1.msra.mxu0 0.0
      %2647 = vmatprep.subr.mxu0 0.0
      %2648 = vmatpush1.msra.mxu0 0.0
      %2649 = vmatprep.subr.mxu0 0.0
      %2650 = vmatpush1.msra.mxu0 0.0
      %2651 = vmatprep.subr.mxu0 0.0
      %2652 = vmatpush1.msra.mxu0 0.0
      %2653 = vmatprep.subr.mxu0 0.0
      %2654 = vmatpush1.msra.mxu0 0.0
      %2655 = vmatprep.subr.mxu0 0.0
      %2656 = vmatpush1.msra.mxu0 0.0
      %2657 = vmatprep.subr.mxu0 0.0
      %2658 = vmatpush1.msra.mxu0 0.0
      %2659 = vmatprep.subr.mxu0 0.0
      %2660 = vmatpush1.msra.mxu0 0.0
      %2661 = vmatprep.subr.mxu0 0.0
      %2662 = vmatpush1.msra.mxu0 0.0
      %2663 = vmatprep.subr.mxu0 0.0
      %2664 = vmatpush1.msra.mxu0 0.0
      %2665 = vmatprep.subr.mxu0 0.0
      %2666 = vmatpush1.msra.mxu0 0.0
      %2667 = vmatprep.subr.mxu0 0.0
      %v2668 = vand.u32 %v1999, 4294901760
      %v2669 = vsub.f32 %v1999, %v2668
      %2670 = vmatpush1.msra.mxu0 %v2669
      %2671 = vmatprep.subr.mxu0 0.0
      %2672 = vmatpush2.msra.mxu0 0.0
      %2673 = vmatprep.subr.mxu0 0.0
      %2674 = vmatpush2.msra.mxu0 0.0
      %2675 = vmatprep.subr.mxu0 0.0
      %2676 = vmatpush2.msra.mxu0 0.0
      %2677 = vmatprep.subr.mxu0 0.0
      %2678 = vmatpush2.msra.mxu0 0.0
      %2679 = vmatprep.subr.mxu0 0.0
      %2680 = vmatpush2.msra.mxu0 0.0
      %2681 = vmatprep.subr.mxu0 0.0
      %2682 = vmatpush2.msra.mxu0 0.0
      %2683 = vmatprep.subr.mxu0 0.0
      %2684 = vmatpush2.msra.mxu0 0.0
      %2685 = vmatprep.subr.mxu0 0.0
      %2686 = vmatpush2.msra.mxu0 0.0
      %2687 = vmatprep.subr.mxu0 0.0
      %2688 = vmatpush2.msra.mxu0 0.0
      %2689 = vmatprep.subr.mxu0 0.0
      %2690 = vmatpush2.msra.mxu0 0.0
      %2691 = vmatprep.subr.mxu0 0.0
      %2692 = vmatpush2.msra.mxu0 0.0
      %2693 = vmatprep.subr.mxu0 0.0
      %2694 = vmatpush2.msra.mxu0 0.0
      %2695 = vmatprep.subr.mxu0 0.0
      %2696 = vmatpush2.msra.mxu0 0.0
      %2697 = vmatprep.subr.mxu0 0.0
      %2698 = vmatpush2.msra.mxu0 0.0
      %2699 = vmatprep.subr.mxu0 0.0
      %2700 = vmatpush2.msra.mxu0 0.0
      %2701 = vmatprep.subr.mxu0 0.0
      %2702 = vmatpush2.msra.mxu0 0.0
      %2703 = vmatprep.mubr.f32.mxu0 0.0
      %v2704 = vand.u32 %v2483, 4294901760
      %v2705 = vsub.f32 %v2483, %v2704
      %2706 = vmatmul.mubr.f32.gmra.mxu0 %v2705
      %v2707 = vpop.f32.mrf.mxu0
      %v2708 = vadd.f32 %v2634, %v2707
      %v2709 = vpop.f32.mrf.mxu0
      %2710 = vdwg.mxu0
      %2711 = vmatprep.subr.mxu0 0.0
      %2712 = vmatpush1.msra.mxu0 0.0
      %2713 = vmatprep.subr.mxu0 0.0
      %2714 = vmatpush1.msra.mxu0 0.0
      %2715 = vmatprep.subr.mxu0 0.0
      %2716 = vmatpush1.msra.mxu0 0.0
      %2717 = vmatprep.subr.mxu0 0.0
      %2718 = vmatpush1.msra.mxu0 0.0
      %2719 = vmatprep.subr.mxu0 0.0
      %2720 = vmatpush1.msra.mxu0 0.0
      %2721 = vmatprep.subr.mxu0 0.0
      %2722 = vmatpush1.msra.mxu0 0.0
      %2723 = vmatprep.subr.mxu0 0.0
      %2724 = vmatpush1.msra.mxu0 0.0
      %2725 = vmatprep.subr.mxu0 0.0
      %2726 = vmatpush1.msra.mxu0 0.0
      %2727 = vmatprep.subr.mxu0 0.0
      %2728 = vmatpush1.msra.mxu0 0.0
      %2729 = vmatprep.subr.mxu0 0.0
      %2730 = vmatpush1.msra.mxu0 0.0
      %2731 = vmatprep.subr.mxu0 0.0
      %2732 = vmatpush1.msra.mxu0 0.0
      %2733 = vmatprep.subr.mxu0 0.0
      %2734 = vmatpush1.msra.mxu0 0.0
      %2735 = vmatprep.subr.mxu0 0.0
      %2736 = vmatpush1.msra.mxu0 0.0
      %2737 = vmatprep.subr.mxu0 0.0
      %2738 = vmatpush1.msra.mxu0 0.0
      %2739 = vmatprep.subr.mxu0 0.0
      %2740 = vmatpush1.msra.mxu0 0.0
      %2741 = vmatprep.subr.mxu0 0.0
      %v2742 = vand.u32 %v1999, 4294901760
      %2743 = vmatpush1.msra.mxu0 %v2742
      %2744 = vmatprep.subr.mxu0 0.0
      %2745 = vmatpush2.msra.mxu0 0.0
      %2746 = vmatprep.subr.mxu0 0.0
      %2747 = vmatpush2.msra.mxu0 0.0
      %2748 = vmatprep.subr.mxu0 0.0
      %2749 = vmatpush2.msra.mxu0 0.0
      %2750 = vmatprep.subr.mxu0 0.0
      %2751 = vmatpush2.msra.mxu0 0.0
      %2752 = vmatprep.subr.mxu0 0.0
      %2753 = vmatpush2.msra.mxu0 0.0
      %2754 = vmatprep.subr.mxu0 0.0
      %2755 = vmatpush2.msra.mxu0 0.0
      %2756 = vmatprep.subr.mxu0 0.0
      %2757 = vmatpush2.msra.mxu0 0.0
      %2758 = vmatprep.subr.mxu0 0.0
      %2759 = vmatpush2.msra.mxu0 0.0
      %2760 = vmatprep.subr.mxu0 0.0
      %2761 = vmatpush2.msra.mxu0 0.0
      %2762 = vmatprep.subr.mxu0 0.0
      %2763 = vmatpush2.msra.mxu0 0.0
      %2764 = vmatprep.subr.mxu0 0.0
      %2765 = vmatpush2.msra.mxu0 0.0
      %2766 = vmatprep.subr.mxu0 0.0
      %2767 = vmatpush2.msra.mxu0 0.0
      %2768 = vmatprep.subr.mxu0 0.0
      %2769 = vmatpush2.msra.mxu0 0.0
      %2770 = vmatprep.subr.mxu0 0.0
      %2771 = vmatpush2.msra.mxu0 0.0
      %2772 = vmatprep.subr.mxu0 0.0
      %2773 = vmatpush2.msra.mxu0 0.0
      %2774 = vmatprep.subr.mxu0 0.0
      %2775 = vmatpush2.msra.mxu0 0.0
      %2776 = vmatprep.mubr.f32.mxu0 0.0
      %v2777 = vand.u32 %v2483, 4294901760
      %v2778 = vsub.f32 %v2483, %v2777
      %v2779 = vand.u32 %v2778, 4294901760
      %2780 = vmatmul.mubr.f32.gmra.mxu0 %v2779
      %v2781 = vpop.f32.mrf.mxu0
      %v2782 = vadd.f32 %v2708, %v2781
      %v2783 = vpop.f32.mrf.mxu0
      %2784 = vdwg.mxu0
      %2785 = vmatprep.subr.mxu0 0.0
      %2786 = vmatpush1.msra.mxu0 0.0
      %2787 = vmatprep.subr.mxu0 0.0
      %2788 = vmatpush1.msra.mxu0 0.0
      %2789 = vmatprep.subr.mxu0 0.0
      %2790 = vmatpush1.msra.mxu0 0.0
      %2791 = vmatprep.subr.mxu0 0.0
      %2792 = vmatpush1.msra.mxu0 0.0
      %2793 = vmatprep.subr.mxu0 0.0
      %2794 = vmatpush1.msra.mxu0 0.0
      %2795 = vmatprep.subr.mxu0 0.0
      %2796 = vmatpush1.msra.mxu0 0.0
      %2797 = vmatprep.subr.mxu0 0.0
      %2798 = vmatpush1.msra.mxu0 0.0
      %2799 = vmatprep.subr.mxu0 0.0
      %2800 = vmatpush1.msra.mxu0 0.0
      %2801 = vmatprep.subr.mxu0 0.0
      %2802 = vmatpush1.msra.mxu0 0.0
      %2803 = vmatprep.subr.mxu0 0.0
      %2804 = vmatpush1.msra.mxu0 0.0
      %2805 = vmatprep.subr.mxu0 0.0
      %2806 = vmatpush1.msra.mxu0 0.0
      %2807 = vmatprep.subr.mxu0 0.0
      %2808 = vmatpush1.msra.mxu0 0.0
      %2809 = vmatprep.subr.mxu0 0.0
      %2810 = vmatpush1.msra.mxu0 0.0
      %2811 = vmatprep.subr.mxu0 0.0
      %2812 = vmatpush1.msra.mxu0 0.0
      %2813 = vmatprep.subr.mxu0 0.0
      %2814 = vmatpush1.msra.mxu0 0.0
      %2815 = vmatprep.subr.mxu0 0.0
      %v2816 = vand.u32 %v1999, 4294901760
      %v2817 = vsub.f32 %v1999, %v2816
      %v2818 = vand.u32 %v2817, 4294901760
      %2819 = vmatpush1.msra.mxu0 %v2818
      %2820 = vmatprep.subr.mxu0 0.0
      %2821 = vmatpush2.msra.mxu0 0.0
      %2822 = vmatprep.subr.mxu0 0.0
      %2823 = vmatpush2.msra.mxu0 0.0
      %2824 = vmatprep.subr.mxu0 0.0
      %2825 = vmatpush2.msra.mxu0 0.0
      %2826 = vmatprep.subr.mxu0 0.0
      %2827 = vmatpush2.msra.mxu0 0.0
      %2828 = vmatprep.subr.mxu0 0.0
      %2829 = vmatpush2.msra.mxu0 0.0
      %2830 = vmatprep.subr.mxu0 0.0
      %2831 = vmatpush2.msra.mxu0 0.0
      %2832 = vmatprep.subr.mxu0 0.0
      %2833 = vmatpush2.msra.mxu0 0.0
      %2834 = vmatprep.subr.mxu0 0.0
      %2835 = vmatpush2.msra.mxu0 0.0
      %2836 = vmatprep.subr.mxu0 0.0
      %2837 = vmatpush2.msra.mxu0 0.0
      %2838 = vmatprep.subr.mxu0 0.0
      %2839 = vmatpush2.msra.mxu0 0.0
      %2840 = vmatprep.subr.mxu0 0.0
      %2841 = vmatpush2.msra.mxu0 0.0
      %2842 = vmatprep.subr.mxu0 0.0
      %2843 = vmatpush2.msra.mxu0 0.0
      %2844 = vmatprep.subr.mxu0 0.0
      %2845 = vmatpush2.msra.mxu0 0.0
      %2846 = vmatprep.subr.mxu0 0.0
      %2847 = vmatpush2.msra.mxu0 0.0
      %2848 = vmatprep.subr.mxu0 0.0
      %2849 = vmatpush2.msra.mxu0 0.0
      %2850 = vmatprep.subr.mxu0 0.0
      %2851 = vmatpush2.msra.mxu0 0.0
      %2852 = vmatprep.mubr.f32.mxu0 0.0
      %v2853 = vand.u32 %v2483, 4294901760
      %2854 = vmatmul.mubr.f32.gmra.mxu0 %v2853
      %v2855 = vpop.f32.mrf.mxu0
      %v2856 = vadd.f32 %v2782, %v2855
      %v2857 = vpop.f32.mrf.mxu0
      %2858 = vdwg.mxu0
      %2859 = vmatprep.subr.mxu0 0.0
      %2860 = vmatpush1.msra.mxu0 0.0
      %2861 = vmatprep.subr.mxu0 0.0
      %2862 = vmatpush1.msra.mxu0 0.0
      %2863 = vmatprep.subr.mxu0 0.0
      %2864 = vmatpush1.msra.mxu0 0.0
      %2865 = vmatprep.subr.mxu0 0.0
      %2866 = vmatpush1.msra.mxu0 0.0
      %2867 = vmatprep.subr.mxu0 0.0
      %2868 = vmatpush1.msra.mxu0 0.0
      %2869 = vmatprep.subr.mxu0 0.0
      %2870 = vmatpush1.msra.mxu0 0.0
      %2871 = vmatprep.subr.mxu0 0.0
      %2872 = vmatpush1.msra.mxu0 0.0
      %2873 = vmatprep.subr.mxu0 0.0
      %2874 = vmatpush1.msra.mxu0 0.0
      %2875 = vmatprep.subr.mxu0 0.0
      %2876 = vmatpush1.msra.mxu0 0.0
      %2877 = vmatprep.subr.mxu0 0.0
      %2878 = vmatpush1.msra.mxu0 0.0
      %2879 = vmatprep.subr.mxu0 0.0
      %2880 = vmatpush1.msra.mxu0 0.0
      %2881 = vmatprep.subr.mxu0 0.0
      %2882 = vmatpush1.msra.mxu0 0.0
      %2883 = vmatprep.subr.mxu0 0.0
      %2884 = vmatpush1.msra.mxu0 0.0
      %2885 = vmatprep.subr.mxu0 0.0
      %2886 = vmatpush1.msra.mxu0 0.0
      %2887 = vmatprep.subr.mxu0 0.0
      %2888 = vmatpush1.msra.mxu0 0.0
      %2889 = vmatprep.subr.mxu0 0.0
      %v2890 = vand.u32 %v1999, 4294901760
      %2891 = vmatpush1.msra.mxu0 %v2890
      %2892 = vmatprep.subr.mxu0 0.0
      %2893 = vmatpush2.msra.mxu0 0.0
      %2894 = vmatprep.subr.mxu0 0.0
      %2895 = vmatpush2.msra.mxu0 0.0
      %2896 = vmatprep.subr.mxu0 0.0
      %2897 = vmatpush2.msra.mxu0 0.0
      %2898 = vmatprep.subr.mxu0 0.0
      %2899 = vmatpush2.msra.mxu0 0.0
      %2900 = vmatprep.subr.mxu0 0.0
      %2901 = vmatpush2.msra.mxu0 0.0
      %2902 = vmatprep.subr.mxu0 0.0
      %2903 = vmatpush2.msra.mxu0 0.0
      %2904 = vmatprep.subr.mxu0 0.0
      %2905 = vmatpush2.msra.mxu0 0.0
      %2906 = vmatprep.subr.mxu0 0.0
      %2907 = vmatpush2.msra.mxu0 0.0
      %2908 = vmatprep.subr.mxu0 0.0
      %2909 = vmatpush2.msra.mxu0 0.0
      %2910 = vmatprep.subr.mxu0 0.0
      %2911 = vmatpush2.msra.mxu0 0.0
      %2912 = vmatprep.subr.mxu0 0.0
      %2913 = vmatpush2.msra.mxu0 0.0
      %2914 = vmatprep.subr.mxu0 0.0
      %2915 = vmatpush2.msra.mxu0 0.0
      %2916 = vmatprep.subr.mxu0 0.0
      %2917 = vmatpush2.msra.mxu0 0.0
      %2918 = vmatprep.subr.mxu0 0.0
      %2919 = vmatpush2.msra.mxu0 0.0
      %2920 = vmatprep.subr.mxu0 0.0
      %2921 = vmatpush2.msra.mxu0 0.0
      %2922 = vmatprep.subr.mxu0 0.0
      %2923 = vmatpush2.msra.mxu0 0.0
      %2924 = vmatprep.mubr.f32.mxu0 0.0
      %v2925 = vand.u32 %v2483, 4294901760
      %2926 = vmatmul.mubr.f32.gmra.mxu0 %v2925
      %v2927 = vpop.f32.mrf.mxu0
      %v2928 = vadd.f32 %v2856, %v2927
      %v2929 = vpop.f32.mrf.mxu0
      %2930 = vdwg.mxu0
      %s2931 = sadd.s32 %s1998, 1
    $region10: #{tpu_custom_call.1} parent=1 // loop_footer
      _
    $region11: #{tpu_custom_call.1} parent=1 // loop_footer_branch
      %1997 = sbr.rel target = $region7
    $region12: #{tpu_custom_call.1} parent=1 // loop_exit
      _
    %2932 = vst.msk [vmem:[#allocation2] sm:$0xff] %vm561, %v1999
    // Predicated region
    $region13: #{tpu_custom_call.1} parent=1 // pred_check
      _
    $region14: #{tpu_custom_call.1} parent=1 // pred_check_branch
      %2934 = sbr.rel (0) target = $region16
    $region15: #{tpu_custom_call.1} parent=1 // pred_region
      %s2936 = ssub.s32 128, 128
      %2937 = vsyncadd [#allocation3], %s2936
      %s2939 = sshll.u32 [#allocation2], 4
      %s2940 = int_to_ptr.vmem [resolvable:$true] %s2939
      %2942 = dma.vmem_to_hbm [thread:$0]  %s2940, 128, %s1, [#allocation3]
    $region16: #{tpu_custom_call.1} parent=1 // pred_fallthru
      _
    // Predicated region
    $region17: #{tpu_custom_call.1} parent=1 // pred_check
      _
    $region18: #{tpu_custom_call.1} parent=1 // pred_check_branch
      %2944 = sbr.rel (0) target = $region20
    $region19: #{tpu_custom_call.1} parent=1 // pred_region
      %2945 = dma.done [#allocation3], 128
    $region20: #{tpu_custom_call.1} parent=1 // pred_fallthru
      _
    %2946 = vsyncpa [#allocation3], 1

</llo_original>
